<compile_context>
chip_gen: v5e
topology: v5e:2x2
jax: 0.10.0
libtpu: 0.0.40
codegen_flags: <defaults>
</compile_context>

<pallas_src>
import functools
import math

import jax
import jax.numpy as jnp
from jax.experimental import pallas as pl
from jax.experimental.pallas import tpu as pltpu


def patch_embed_kernel(x_ref, w1s_ref, b1_ref, w2_ref, b2_ref, o_ref, *, precision):
    # x_ref  : (Bt, inputs, TT, D) VMEM   input tile (batch-tile x inputs x time-tile x D)
    # w1s_ref: (inputs, D, H1p)           conv_w[i] * W1  (conv folded into first Linear)
    # b1_ref : (1, H1p)                   b1 + conv_b * W1.sum(0)  (zeros in padded lanes)
    # w2_ref : (H1p, E), b2_ref: (1, E)
    # o_ref  : (Bt, TT, E)
    bt, n_in, tt, d = x_ref.shape
    rows = bt * tt

    # `inputs` reduction on the MXU:  acc = sum_i  x[:, i] @ (conv_w[i] * W1)
    # (Bt, TT, D) -> (Bt*TT, D) is a layout-trivial leading-dim merge (TT % 8 == 0 or Bt == 1).
    acc = jnp.dot(x_ref[:, 0, :, :].reshape(rows, d), w1s_ref[0],
                  preferred_element_type=jnp.float32, precision=precision)
    for i in range(1, n_in):  # static, tiny trip count
        acc = acc + jnp.dot(x_ref[:, i, :, :].reshape(rows, d), w1s_ref[i],
                            preferred_element_type=jnp.float32, precision=precision)

    # proj: (folded) Linear -> ReLU -> Linear
    h = jnp.maximum(acc + b1_ref[...], 0.0)                       # (rows, H1p), lane-dense
    o = jnp.dot(h, w2_ref[...], preferred_element_type=jnp.float32,
                precision=precision) + b2_ref[...]
    o_ref[...] = o.reshape(o_ref.shape).astype(o_ref.dtype)


def patch_embedding(x, conv_w, conv_b, w1_t, b1, w2_t, b2, *,
                    max_rows_per_step=1024,
                    matmul_precision=jax.lax.Precision.HIGHEST):
    """x: (batch, inputs, time, ch, h, w) float32.  Returns (batch, time, embed_dim)."""
    batch, inputs, time, ch, h, w = x.shape
    D = ch * h * w
    H1 = w1_t.shape[1]
    E = w2_t.shape[1]
    H1p = -(-H1 // 128) * 128  # lane-dense hidden width

    # Free reshape (no HBM transpose): flatten the contiguous (ch, h, w) dims -> D.
    x_r = x.reshape(batch, inputs, time, D)

    # Zero-pad the hidden dim to a multiple of 128 (padded columns/rows are zero -> no-op).
    w1_p = jnp.pad(w1_t, ((0, 0), (0, H1p - H1)))
    b1_p = jnp.pad(b1, (0, H1p - H1))
    w2_p = jnp.pad(w2_t, ((0, H1p - H1), (0, 0)))

    # Fold the 1x1x1 conv into the first Linear:
    #   relu((sum_i cw[i]*x_i + cb) @ W1 + b1)
    #     == relu(sum_i x_i @ (cw[i]*W1) + (b1 + cb * W1.sum(0)))
    w1s = conv_w[:, None, None] * w1_p[None, :, :]                 # (inputs, D, H1p)
    b1_fold = (b1_p + conv_b[0] * jnp.sum(w1_p, axis=0)).reshape(1, H1p)
    b2_r = b2.reshape(1, E)

    # ---- Tile selection: target ~max_rows_per_step rows/step under a VMEM row-budget.
    bytes_per_row = 4 * (2 * inputs * D + 2 * E + 2 * H1p)   # x dbuf + out dbuf + temps
    row_budget = 20 << 20                                    # row-dependent residency cap
    rows_cap = max(8, row_budget // bytes_per_row)
    target_rows = int(min(max_rows_per_step, rows_cap))

    if time >= target_rows:
        TT = max(8, (target_rows // 8) * 8)
        Bt = 1
    else:
        TT = time
        Bt = min(batch, max(1, target_rows // max(time, 1)))
    if TT % 8 != 0:
        Bt = 1  # keep the in-kernel (Bt, TT, D) -> (Bt*TT, D) merge layout-trivial

    # Keep >=2 grid steps when there is enough work so v7x's two TensorCores both run.
    if pl.cdiv(batch, Bt) * pl.cdiv(time, TT) == 1:
        if Bt > 1 and pl.cdiv(Bt, 2) * TT >= 128:
            Bt = pl.cdiv(Bt, 2)
        elif Bt == 1 and TT >= 256 and (TT // 2) % 8 == 0:
            TT = TT // 2

    grid = (pl.cdiv(batch, Bt), pl.cdiv(time, TT))

    # ---- Explicit VMEM limit: 2x x-tile + 2x out-tile + weights + temporaries, 2x headroom,
    # clamped to a range legal on all generations (>= defaults, << v7x's 64 MiB physical).
    x_tile = 4 * Bt * inputs * TT * D
    out_tile = 4 * Bt * TT * E
    w_bytes = 4 * (inputs * D * H1p + H1p + H1p * E + E)
    temps = 4 * Bt * TT * (H1p + E)
    need = 2 * x_tile + 2 * out_tile + 2 * w_bytes + 2 * temps
    vmem_limit = int(min(max(2 * need, 32 << 20), 48 << 20))

    flops = 2 * batch * time * (inputs * D * H1p + H1p * E)
    bytes_accessed = 4 * (x_r.size + inputs * D * H1p + H1p + H1p * E + E
                          + batch * time * E)

    kernel = functools.partial(patch_embed_kernel, precision=matmul_precision)

    out = pl.pallas_call(
        kernel,
        out_shape=jax.ShapeDtypeStruct((batch, time, E), jnp.float32),
        grid=grid,
        in_specs=[
            pl.BlockSpec((Bt, inputs, TT, D), lambda b, t: (b, 0, t, 0)),  # x tile
            pl.BlockSpec((inputs, D, H1p), lambda b, t: (0, 0, 0)),        # conv-scaled W1
            pl.BlockSpec((1, H1p), lambda b, t: (0, 0)),                   # folded bias1
            pl.BlockSpec((H1p, E), lambda b, t: (0, 0)),                   # W2
            pl.BlockSpec((1, E), lambda b, t: (0, 0)),                     # bias2
        ],
        out_specs=pl.BlockSpec((Bt, TT, E), lambda b, t: (b, t, 0)),
        compiler_params=pltpu.CompilerParams(
            dimension_semantics=("parallel", "parallel"),
            vmem_limit_bytes=vmem_limit),
        cost_estimate=pl.CostEstimate(
            flops=flops, transcendentals=0, bytes_accessed=bytes_accessed),
    )(x_r, w1s, b1_fold, w2_p, b2_r)
    return out


def _reference(x, conv_w, conv_b, w1_t, b1, w2_t, b2):
    batch, inputs, time, ch, h, w = x.shape
    D = ch * h * w
    hp = jax.lax.Precision.HIGHEST
    xp = jnp.transpose(x, (0, 2, 1, 3, 4, 5)).reshape(batch, time, inputs, D)
    z = jnp.einsum("btid,i->btd", xp, conv_w, precision=hp) + conv_b[0]
    h1 = jnp.maximum(jnp.dot(z, w1_t, precision=hp) + b1, 0.0)
    return jnp.dot(h1, w2_t, precision=hp) + b2


if __name__ == "__main__":
    # Small shapes consistent with the module:
    batch, inputs, time, ch, h, w = 2, 3, 8, 4, 8, 8
    D = ch * h * w            # input_dim = 256
    H1 = D // 4               # 64
    E = 32                    # embed_dim

    key = jax.random.PRNGKey(0)
    kx, kcw, kcb, kw1, kb1, kw2, kb2 = jax.random.split(key, 7)

    x = jax.random.normal(kx, (batch, inputs, time, ch, h, w), dtype=jnp.float32)

    # Deterministic PyTorch-style (kaiming-uniform-ish) parameter init.
    bc = 1.0 / math.sqrt(inputs)
    conv_w = jax.random.uniform(kcw, (inputs,), minval=-bc, maxval=bc, dtype=jnp.float32)
    conv_b = jax.random.uniform(kcb, (1,), minval=-bc, maxval=bc, dtype=jnp.float32)

    b1_bound = 1.0 / math.sqrt(D)
    w1_t = jax.random.uniform(kw1, (D, H1), minval=-b1_bound, maxval=b1_bound, dtype=jnp.float32)
    b1 = jax.random.uniform(kb1, (H1,), minval=-b1_bound, maxval=b1_bound, dtype=jnp.float32)

    b2_bound = 1.0 / math.sqrt(H1)
    w2_t = jax.random.uniform(kw2, (H1, E), minval=-b2_bound, maxval=b2_bound, dtype=jnp.float32)
    b2 = jax.random.uniform(kb2, (E,), minval=-b2_bound, maxval=b2_bound, dtype=jnp.float32)

    out = patch_embedding(x, conv_w, conv_b, w1_t, b1, w2_t, b2)
    out = jax.block_until_ready(out)

    ref = _reference(x, conv_w, conv_b, w1_t, b1, w2_t, b2)
    assert out.shape == (batch, time, E), out.shape
    # With Precision.HIGHEST honored the observed error is ~1e-6; the tolerance below also
    # covers a worst-case fall-back to single-pass bf16 MXU operands on some generations.
    assert jnp.allclose(out, ref, atol=5e-3, rtol=5e-3), float(jnp.max(jnp.abs(out - ref)))

    print("KERNEL_OK")
</pallas_src>

<mosaic_0001>
module attributes {stable_mosaic.version = 11 : i64} {
  func.func @patch_embed_kernel(%arg0: i32, %arg1: i32, %arg2: memref<2x3x8x256xf32, #tpu.memory_space<vmem>>, %arg3: memref<3x256x128xf32, #tpu.memory_space<vmem>>, %arg4: memref<1x128xf32, #tpu.memory_space<vmem>>, %arg5: memref<128x32xf32, #tpu.memory_space<vmem>>, %arg6: memref<1x32xf32, #tpu.memory_space<vmem>>, %arg7: memref<2x8x32xf32, #tpu.memory_space<vmem>>) attributes {dimension_semantics = [#tpu.dimension_semantics<parallel>, #tpu.dimension_semantics<parallel>], iteration_bounds = array<i64: 1, 1>, scalar_prefetch = 0 : i64, scratch_operands = 0 : i64, tpu.core_type = #tpu.core_type<tc>, window_params = [{transform_indices = @transform_0, window_bounds = array<i64: 2, 3, 8, 256>}, {pipeline_mode = #tpu.pipeline_mode<synchronous>, transform_indices = @transform_1, window_bounds = array<i64: 3, 256, 128>}, {pipeline_mode = #tpu.pipeline_mode<synchronous>, transform_indices = @transform_2, window_bounds = array<i64: 1, 128>}, {pipeline_mode = #tpu.pipeline_mode<synchronous>, transform_indices = @transform_3, window_bounds = array<i64: 128, 32>}, {pipeline_mode = #tpu.pipeline_mode<synchronous>, transform_indices = @transform_4, window_bounds = array<i64: 1, 32>}, {transform_indices = @transform_5, window_bounds = array<i64: 2, 8, 32>}]} {
    %c0 = arith.constant 0 : index
    %c0_0 = arith.constant 0 : index
    %c0_1 = arith.constant 0 : index
    %c0_2 = arith.constant 0 : index
    %0 = vector.load %arg2[%c0, %c0_0, %c0_1, %c0_2] : memref<2x3x8x256xf32, #tpu.memory_space<vmem>>, vector<2x1x8x256xf32>
    %1 = vector.shape_cast %0 : vector<2x1x8x256xf32> to vector<2x8x256xf32>
    %2 = vector.shape_cast %1 : vector<2x8x256xf32> to vector<16x256xf32>
    %c0_3 = arith.constant 0 : index
    %c0_4 = arith.constant 0 : index
    %c0_5 = arith.constant 0 : index
    %3 = vector.load %arg3[%c0_3, %c0_4, %c0_5] : memref<3x256x128xf32, #tpu.memory_space<vmem>>, vector<1x256x128xf32>
    %4 = vector.shape_cast %3 : vector<1x256x128xf32> to vector<256x128xf32>
    %cst = arith.constant dense<0.000000e+00> : vector<16x128xf32>
    %5 = tpu.matmul %2, %4, %cst {dimension_numbers = #tpu.dot_dimension_numbers<[1], [0], [0], [1], [0, 0, 1, 1], [], []>, precision = #tpu.contract_precision<fp32>} : vector<16x256xf32>, vector<256x128xf32>, vector<16x128xf32> -> vector<16x128xf32>
    %c0_6 = arith.constant 0 : index
    %c1 = arith.constant 1 : index
    %c0_7 = arith.constant 0 : index
    %c0_8 = arith.constant 0 : index
    %6 = vector.load %arg2[%c0_6, %c1, %c0_7, %c0_8] : memref<2x3x8x256xf32, #tpu.memory_space<vmem>>, vector<2x1x8x256xf32>
    %7 = vector.shape_cast %6 : vector<2x1x8x256xf32> to vector<2x8x256xf32>
    %8 = vector.shape_cast %7 : vector<2x8x256xf32> to vector<16x256xf32>
    %c1_9 = arith.constant 1 : index
    %c0_10 = arith.constant 0 : index
    %c0_11 = arith.constant 0 : index
    %9 = vector.load %arg3[%c1_9, %c0_10, %c0_11] : memref<3x256x128xf32, #tpu.memory_space<vmem>>, vector<1x256x128xf32>
    %10 = vector.shape_cast %9 : vector<1x256x128xf32> to vector<256x128xf32>
    %cst_12 = arith.constant dense<0.000000e+00> : vector<16x128xf32>
    %11 = tpu.matmul %8, %10, %cst_12 {dimension_numbers = #tpu.dot_dimension_numbers<[1], [0], [0], [1], [0, 0, 1, 1], [], []>, precision = #tpu.contract_precision<fp32>} : vector<16x256xf32>, vector<256x128xf32>, vector<16x128xf32> -> vector<16x128xf32>
    %12 = arith.addf %5, %11 : vector<16x128xf32>
    %c0_13 = arith.constant 0 : index
    %c2 = arith.constant 2 : index
    %c0_14 = arith.constant 0 : index
    %c0_15 = arith.constant 0 : index
    %13 = vector.load %arg2[%c0_13, %c2, %c0_14, %c0_15] : memref<2x3x8x256xf32, #tpu.memory_space<vmem>>, vector<2x1x8x256xf32>
    %14 = vector.shape_cast %13 : vector<2x1x8x256xf32> to vector<2x8x256xf32>
    %15 = vector.shape_cast %14 : vector<2x8x256xf32> to vector<16x256xf32>
    %c2_16 = arith.constant 2 : index
    %c0_17 = arith.constant 0 : index
    %c0_18 = arith.constant 0 : index
    %16 = vector.load %arg3[%c2_16, %c0_17, %c0_18] : memref<3x256x128xf32, #tpu.memory_space<vmem>>, vector<1x256x128xf32>
    %17 = vector.shape_cast %16 : vector<1x256x128xf32> to vector<256x128xf32>
    %cst_19 = arith.constant dense<0.000000e+00> : vector<16x128xf32>
    %18 = tpu.matmul %15, %17, %cst_19 {dimension_numbers = #tpu.dot_dimension_numbers<[1], [0], [0], [1], [0, 0, 1, 1], [], []>, precision = #tpu.contract_precision<fp32>} : vector<16x256xf32>, vector<256x128xf32>, vector<16x128xf32> -> vector<16x128xf32>
    %19 = arith.addf %12, %18 : vector<16x128xf32>
    %c0_20 = arith.constant 0 : index
    %c0_21 = arith.constant 0 : index
    %20 = vector.load %arg4[%c0_20, %c0_21] : memref<1x128xf32, #tpu.memory_space<vmem>>, vector<1x128xf32>
    %21 = vector.broadcast %20 : vector<1x128xf32> to vector<16x128xf32>
    %22 = arith.addf %19, %21 : vector<16x128xf32>
    %cst_22 = arith.constant 0.000000e+00 : f32
    %23 = vector.broadcast %cst_22 : f32 to vector<16x128xf32>
    %24 = arith.maximumf %22, %23 : vector<16x128xf32>
    %c0_23 = arith.constant 0 : index
    %c0_24 = arith.constant 0 : index
    %25 = vector.load %arg5[%c0_23, %c0_24] : memref<128x32xf32, #tpu.memory_space<vmem>>, vector<128x32xf32>
    %cst_25 = arith.constant dense<0.000000e+00> : vector<16x32xf32>
    %26 = tpu.matmul %24, %25, %cst_25 {dimension_numbers = #tpu.dot_dimension_numbers<[1], [0], [0], [1], [0, 0, 1, 1], [], []>, precision = #tpu.contract_precision<fp32>} : vector<16x128xf32>, vector<128x32xf32>, vector<16x32xf32> -> vector<16x32xf32>
    %c0_26 = arith.constant 0 : index
    %c0_27 = arith.constant 0 : index
    %27 = vector.load %arg6[%c0_26, %c0_27] : memref<1x32xf32, #tpu.memory_space<vmem>>, vector<1x32xf32>
    %28 = vector.broadcast %27 : vector<1x32xf32> to vector<16x32xf32>
    %29 = arith.addf %26, %28 : vector<16x32xf32>
    %30 = vector.shape_cast %29 : vector<16x32xf32> to vector<2x8x32xf32>
    %c0_28 = arith.constant 0 : index
    %c0_29 = arith.constant 0 : index
    %c0_30 = arith.constant 0 : index
    %31 = vector.load %arg7[%c0_28, %c0_29, %c0_30] : memref<2x8x32xf32, #tpu.memory_space<vmem>>, vector<2x8x32xf32>
    tpu.vector_store %arg7[%c0_28, %c0_29, %c0_30], %30 {strides = array<i32>} : memref<2x8x32xf32, #tpu.memory_space<vmem>>, vector<2x8x32xf32>,
    return
  }
  func.func @transform_0(%arg0: i32, %arg1: i32) -> (i32, i32, i32, i32) {
    %c0_i32 = arith.constant 0 : i32
    %c0_i32_0 = arith.constant 0 : i32
    %c0_i32_1 = arith.constant 0 : i32
    return %arg0, %c0_i32, %arg1, %c0_i32_0 : i32, i32, i32, i32
  }
  func.func @transform_1(%arg0: i32, %arg1: i32) -> (i32, i32, i32) {
    %c0_i32 = arith.constant 0 : i32
    %c0_i32_0 = arith.constant 0 : i32
    %c0_i32_1 = arith.constant 0 : i32
    %c0_i32_2 = arith.constant 0 : i32
    return %c0_i32, %c0_i32_0, %c0_i32_1 : i32, i32, i32
  }
  func.func @transform_2(%arg0: i32, %arg1: i32) -> (i32, i32) {
    %c0_i32 = arith.constant 0 : i32
    %c0_i32_0 = arith.constant 0 : i32
    %c0_i32_1 = arith.constant 0 : i32
    return %c0_i32, %c0_i32_0 : i32, i32
  }
  func.func @transform_3(%arg0: i32, %arg1: i32) -> (i32, i32) {
    %c0_i32 = arith.constant 0 : i32
    %c0_i32_0 = arith.constant 0 : i32
    %c0_i32_1 = arith.constant 0 : i32
    return %c0_i32, %c0_i32_0 : i32, i32
  }
  func.func @transform_4(%arg0: i32, %arg1: i32) -> (i32, i32) {
    %c0_i32 = arith.constant 0 : i32
    %c0_i32_0 = arith.constant 0 : i32
    %c0_i32_1 = arith.constant 0 : i32
    return %c0_i32, %c0_i32_0 : i32, i32
  }
  func.func @transform_5(%arg0: i32, %arg1: i32) -> (i32, i32, i32) {
    %c0_i32 = arith.constant 0 : i32
    %c0_i32_0 = arith.constant 0 : i32
    return %arg0, %arg1, %c0_i32 : i32, i32, i32
  }
}

</mosaic_0001>

<llo_original>
// kernel: tpu_custom_call.1
$region0: #{tpu_custom_call.1}
  #allocation0 [shape = 'u32[]', space=smem, size = 0x4, offset = 0x4, fixed_abs, tag = 'smem constant byte address 0x4 - core index']
  #allocation1 [shape = 'u32[72,128]{1,0:T(1,128)}', space=vmem, size = 0x9000, scoped, tag = 'internal scratch']
  %s0 = inlined_call_operand.vmem [shape: f32[2,3,8,256], index: 0, kind: input, shape index: {}]
  %s1 = inlined_call_operand.hbm [shape: f32[3,256,128], index: 1, kind: input, shape index: {}]
  %s2 = inlined_call_operand.vmem [shape: f32[1,128], index: 2, kind: input, shape index: {}]
  %s3 = inlined_call_operand.vmem [shape: f32[128,32], index: 3, kind: input, shape index: {}]
  %s4 = inlined_call_operand.vmem [shape: f32[1,32], index: 4, kind: input, shape index: {}]
  %s5 = inlined_call_operand.hbm [shape: f32[2,8,32], index: 5, kind: output, shape index: {}]
  %s6 = sld [smem:[#allocation0]]
  $region34: #{tpu_custom_call.1} parent=0
    _
  %s8 = ssub.s32 1, %s6
  %s9 = scalar_select 0, %s8, %s6
  $region1: #{tpu_custom_call.1} parent=0
    #allocation2 [shape = 'u8[393216]{0}', space=vmem, size = 0x60000, scoped, tag = 'input window, operand 1, single buffered']
    #allocation3 [shape = 's32[1]{0}', space=sflag, size = 0x4, scoped, tag = 'scoped memory for tpu_custom_call.1']
    #allocation4 [shape = 's32[1]{0}', space=sflag, size = 0x4, scoped, tag = 'scoped memory for tpu_custom_call.1']
    #allocation5 [shape = 'u8[8192]{0}', space=vmem, size = 0x2000, scoped, tag = 'output window, operand 0, single buffered']
    %10 = vsyncpa [#allocation3], 0
    %11 = vsyncpa [#allocation4], 0
    // Predicated region
    $region2: #{tpu_custom_call.1} parent=1 // pred_check
      _
    $region3: #{tpu_custom_call.1} parent=1 // pred_check_branch
      %13 = sbr.rel (0) target = $region5
    $region4: #{tpu_custom_call.1} parent=1 // pred_region
      _
    $region5: #{tpu_custom_call.1} parent=1 // pred_fallthru
      _
    // Predicated region
    $region6: #{tpu_custom_call.1} parent=1 // pred_check
      _
    $region7: #{tpu_custom_call.1} parent=1 // pred_check_branch
      %15 = sbr.rel (0) target = $region9
    $region8: #{tpu_custom_call.1} parent=1 // pred_region
      %17 = vsyncadd [#allocation3], 0
      %s18 = sshll.u32 %s1, 4
      %s19 = int_to_ptr.hbm [resolvable:$true] %s18
      %s20 = sshll.u32 [#allocation2], 4
      %s21 = int_to_ptr.vmem [resolvable:$true] %s20
      %26 = dma.hbm_to_vmem [thread:$0]  %s19, 12288, %s21, [#allocation3], 128, 128, 8
    $region9: #{tpu_custom_call.1} parent=1 // pred_fallthru
      _
    // Predicated region
    $region10: #{tpu_custom_call.1} parent=1 // pred_check
      _
    $region11: #{tpu_custom_call.1} parent=1 // pred_check_branch
      %28 = sbr.rel (0) target = $region13
    $region12: #{tpu_custom_call.1} parent=1 // pred_region
      _
    $region13: #{tpu_custom_call.1} parent=1 // pred_fallthru
      _
    // Predicated region
    $region14: #{tpu_custom_call.1} parent=1 // pred_check
      _
    $region15: #{tpu_custom_call.1} parent=1 // pred_check_branch
      %30 = sbr.rel (0) target = $region17
    $region16: #{tpu_custom_call.1} parent=1 // pred_region
      _
    $region17: #{tpu_custom_call.1} parent=1 // pred_fallthru
      _
    // Predicated region
    $region18: #{tpu_custom_call.1} parent=1 // pred_check
      _
    $region19: #{tpu_custom_call.1} parent=1 // pred_check_branch
      %32 = sbr.rel (0) target = $region21
    $region20: #{tpu_custom_call.1} parent=1 // pred_region
      _
    $region21: #{tpu_custom_call.1} parent=1 // pred_fallthru
      _
    // Predicated region
    $region22: #{tpu_custom_call.1} parent=1 // pred_check
      _
    $region23: #{tpu_custom_call.1} parent=1 // pred_check_branch
      %34 = sbr.rel (0) target = $region25
    $region24: #{tpu_custom_call.1} parent=1 // pred_region
      %36 = dma.done [#allocation3], 12288
    $region25: #{tpu_custom_call.1} parent=1 // pred_fallthru
      _
    %v37 = vld [vmem:[%s0] sm:$0xff]
    %v38 = vld [vmem:[%s0 + $0x8] sm:$0xff]
    %v39 = vld [vmem:[%s0 + $0x30] sm:$0xff]
    %v40 = vld [vmem:[%s0 + $0x38] sm:$0xff]
    %v41 = vld [vmem:[#allocation2] sm:$0xff]
    %v42 = vld [vmem:[#allocation2 + $0x8] sm:$0xff]
    %v43 = vld [vmem:[#allocation2 + $0x10] sm:$0xff]
    %v44 = vld [vmem:[#allocation2 + $0x18] sm:$0xff]
    %v45 = vld [vmem:[#allocation2 + $0x20] sm:$0xff]
    %v46 = vld [vmem:[#allocation2 + $0x28] sm:$0xff]
    %v47 = vld [vmem:[#allocation2 + $0x30] sm:$0xff]
    %v48 = vld [vmem:[#allocation2 + $0x38] sm:$0xff]
    %v49 = vld [vmem:[#allocation2 + $0x40] sm:$0xff]
    %v50 = vld [vmem:[#allocation2 + $0x48] sm:$0xff]
    %v51 = vld [vmem:[#allocation2 + $0x50] sm:$0xff]
    %v52 = vld [vmem:[#allocation2 + $0x58] sm:$0xff]
    %v53 = vld [vmem:[#allocation2 + $0x60] sm:$0xff]
    %v54 = vld [vmem:[#allocation2 + $0x68] sm:$0xff]
    %v55 = vld [vmem:[#allocation2 + $0x70] sm:$0xff]
    %v56 = vld [vmem:[#allocation2 + $0x78] sm:$0xff]
    %v57 = vld [vmem:[#allocation2 + $0x80] sm:$0xff]
    %v58 = vld [vmem:[#allocation2 + $0x88] sm:$0xff]
    %v59 = vld [vmem:[#allocation2 + $0x90] sm:$0xff]
    %v60 = vld [vmem:[#allocation2 + $0x98] sm:$0xff]
    %v61 = vld [vmem:[#allocation2 + $0xa0] sm:$0xff]
    %v62 = vld [vmem:[#allocation2 + $0xa8] sm:$0xff]
    %v63 = vld [vmem:[#allocation2 + $0xb0] sm:$0xff]
    %v64 = vld [vmem:[#allocation2 + $0xb8] sm:$0xff]
    %v65 = vld [vmem:[#allocation2 + $0xc0] sm:$0xff]
    %v66 = vld [vmem:[#allocation2 + $0xc8] sm:$0xff]
    %v67 = vld [vmem:[#allocation2 + $0xd0] sm:$0xff]
    %v68 = vld [vmem:[#allocation2 + $0xd8] sm:$0xff]
    %v69 = vld [vmem:[#allocation2 + $0xe0] sm:$0xff]
    %v70 = vld [vmem:[#allocation2 + $0xe8] sm:$0xff]
    %v71 = vld [vmem:[#allocation2 + $0xf0] sm:$0xff]
    %v72 = vld [vmem:[#allocation2 + $0xf8] sm:$0xff]
    %s73 = scalar_lea.vmem %s0, 16
    %v74 = vld [vmem:[%s73] sm:$0xff]
    %v75 = vld [vmem:[%s73 + $0x8] sm:$0xff]
    %v76 = vld [vmem:[%s73 + $0x30] sm:$0xff]
    %v77 = vld [vmem:[%s73 + $0x38] sm:$0xff]
    %s78 = scalar_lea.vmem [#allocation2], 256
    %v79 = vld [vmem:[%s78] sm:$0xff]
    %v80 = vld [vmem:[%s78 + $0x8] sm:$0xff]
    %v81 = vld [vmem:[%s78 + $0x10] sm:$0xff]
    %v82 = vld [vmem:[%s78 + $0x18] sm:$0xff]
    %v83 = vld [vmem:[%s78 + $0x20] sm:$0xff]
    %v84 = vld [vmem:[%s78 + $0x28] sm:$0xff]
    %v85 = vld [vmem:[%s78 + $0x30] sm:$0xff]
    %v86 = vld [vmem:[%s78 + $0x38] sm:$0xff]
    %v87 = vld [vmem:[%s78 + $0x40] sm:$0xff]
    %v88 = vld [vmem:[%s78 + $0x48] sm:$0xff]
    %v89 = vld [vmem:[%s78 + $0x50] sm:$0xff]
    %v90 = vld [vmem:[%s78 + $0x58] sm:$0xff]
    %v91 = vld [vmem:[%s78 + $0x60] sm:$0xff]
    %v92 = vld [vmem:[%s78 + $0x68] sm:$0xff]
    %v93 = vld [vmem:[%s78 + $0x70] sm:$0xff]
    %v94 = vld [vmem:[%s78 + $0x78] sm:$0xff]
    %v95 = vld [vmem:[%s78 + $0x80] sm:$0xff]
    %v96 = vld [vmem:[%s78 + $0x88] sm:$0xff]
    %v97 = vld [vmem:[%s78 + $0x90] sm:$0xff]
    %v98 = vld [vmem:[%s78 + $0x98] sm:$0xff]
    %v99 = vld [vmem:[%s78 + $0xa0] sm:$0xff]
    %v100 = vld [vmem:[%s78 + $0xa8] sm:$0xff]
    %v101 = vld [vmem:[%s78 + $0xb0] sm:$0xff]
    %v102 = vld [vmem:[%s78 + $0xb8] sm:$0xff]
    %v103 = vld [vmem:[%s78 + $0xc0] sm:$0xff]
    %v104 = vld [vmem:[%s78 + $0xc8] sm:$0xff]
    %v105 = vld [vmem:[%s78 + $0xd0] sm:$0xff]
    %v106 = vld [vmem:[%s78 + $0xd8] sm:$0xff]
    %v107 = vld [vmem:[%s78 + $0xe0] sm:$0xff]
    %v108 = vld [vmem:[%s78 + $0xe8] sm:$0xff]
    %v109 = vld [vmem:[%s78 + $0xf0] sm:$0xff]
    %v110 = vld [vmem:[%s78 + $0xf8] sm:$0xff]
    %v111 = vand.u32 %v94, 4294901760
    %112 = vmatpush.msra.mxu0 %v111
    %v113 = vand.u32 %v93, 4294901760
    %114 = vmatpush.msra.mxu0 %v113
    %v115 = vand.u32 %v92, 4294901760
    %116 = vmatpush.msra.mxu0 %v115
    %v117 = vand.u32 %v91, 4294901760
    %118 = vmatpush.msra.mxu0 %v117
    %v119 = vand.u32 %v90, 4294901760
    %120 = vmatpush.msra.mxu0 %v119
    %v121 = vand.u32 %v89, 4294901760
    %122 = vmatpush.msra.mxu0 %v121
    %v123 = vand.u32 %v88, 4294901760
    %124 = vmatpush.msra.mxu0 %v123
    %v125 = vand.u32 %v87, 4294901760
    %126 = vmatpush.msra.mxu0 %v125
    %v127 = vand.u32 %v86, 4294901760
    %128 = vmatpush.msra.mxu0 %v127
    %v129 = vand.u32 %v85, 4294901760
    %130 = vmatpush.msra.mxu0 %v129
    %v131 = vand.u32 %v84, 4294901760
    %132 = vmatpush.msra.mxu0 %v131
    %v133 = vand.u32 %v83, 4294901760
    %134 = vmatpush.msra.mxu0 %v133
    %v135 = vand.u32 %v82, 4294901760
    %136 = vmatpush.msra.mxu0 %v135
    %v137 = vand.u32 %v81, 4294901760
    %138 = vmatpush.msra.mxu0 %v137
    %v139 = vand.u32 %v80, 4294901760
    %140 = vmatpush.msra.mxu0 %v139
    %v141 = vand.u32 %v79, 4294901760
    %142 = vmatpush.msra.mxu0 %v141
    %v143 = vand.u32 %v74, 4294901760
    %v144 = vsub.f32 %v74, %v143
    %v145 = vand.u32 %v144, 4294901760
    %v146 = vsub.f32 %v144, %v145
    %v147 = vand.u32 %v146, 4294901760
    %148 = vmatmul.f32.gmra.mxu0 %v147
    %v149 = vpop.f32.mrf.mxu0
    %v150 = vadd.f32 0.0, %v149
    %v151 = vand.u32 %v76, 4294901760
    %v152 = vsub.f32 %v76, %v151
    %v153 = vand.u32 %v152, 4294901760
    %v154 = vsub.f32 %v152, %v153
    %v155 = vand.u32 %v154, 4294901760
    %156 = vmatmul.f32.gmra.mxu0 %v155
    %v157 = vpop.f32.mrf.mxu0
    %v158 = vadd.f32 0.0, %v157
    %159 = vdwg.mxu0
    %v160 = vand.u32 %v94, 4294901760
    %v161 = vsub.f32 %v94, %v160
    %v162 = vand.u32 %v161, 4294901760
    %v163 = vsub.f32 %v161, %v162
    %v164 = vand.u32 %v163, 4294901760
    %165 = vmatpush.msra.mxu0 %v164
    %v166 = vand.u32 %v93, 4294901760
    %v167 = vsub.f32 %v93, %v166
    %v168 = vand.u32 %v167, 4294901760
    %v169 = vsub.f32 %v167, %v168
    %v170 = vand.u32 %v169, 4294901760
    %171 = vmatpush.msra.mxu0 %v170
    %v172 = vand.u32 %v92, 4294901760
    %v173 = vsub.f32 %v92, %v172
    %v174 = vand.u32 %v173, 4294901760
    %v175 = vsub.f32 %v173, %v174
    %v176 = vand.u32 %v175, 4294901760
    %177 = vmatpush.msra.mxu0 %v176
    %v178 = vand.u32 %v91, 4294901760
    %v179 = vsub.f32 %v91, %v178
    %v180 = vand.u32 %v179, 4294901760
    %v181 = vsub.f32 %v179, %v180
    %v182 = vand.u32 %v181, 4294901760
    %183 = vmatpush.msra.mxu0 %v182
    %v184 = vand.u32 %v90, 4294901760
    %v185 = vsub.f32 %v90, %v184
    %v186 = vand.u32 %v185, 4294901760
    %v187 = vsub.f32 %v185, %v186
    %v188 = vand.u32 %v187, 4294901760
    %189 = vmatpush.msra.mxu0 %v188
    %v190 = vand.u32 %v89, 4294901760
    %v191 = vsub.f32 %v89, %v190
    %v192 = vand.u32 %v191, 4294901760
    %v193 = vsub.f32 %v191, %v192
    %v194 = vand.u32 %v193, 4294901760
    %195 = vmatpush.msra.mxu0 %v194
    %v196 = vand.u32 %v88, 4294901760
    %v197 = vsub.f32 %v88, %v196
    %v198 = vand.u32 %v197, 4294901760
    %v199 = vsub.f32 %v197, %v198
    %v200 = vand.u32 %v199, 4294901760
    %201 = vmatpush.msra.mxu0 %v200
    %v202 = vand.u32 %v87, 4294901760
    %v203 = vsub.f32 %v87, %v202
    %v204 = vand.u32 %v203, 4294901760
    %v205 = vsub.f32 %v203, %v204
    %v206 = vand.u32 %v205, 4294901760
    %207 = vmatpush.msra.mxu0 %v206
    %v208 = vand.u32 %v86, 4294901760
    %v209 = vsub.f32 %v86, %v208
    %v210 = vand.u32 %v209, 4294901760
    %v211 = vsub.f32 %v209, %v210
    %v212 = vand.u32 %v211, 4294901760
    %213 = vmatpush.msra.mxu0 %v212
    %v214 = vand.u32 %v85, 4294901760
    %v215 = vsub.f32 %v85, %v214
    %v216 = vand.u32 %v215, 4294901760
    %v217 = vsub.f32 %v215, %v216
    %v218 = vand.u32 %v217, 4294901760
    %219 = vmatpush.msra.mxu0 %v218
    %v220 = vand.u32 %v84, 4294901760
    %v221 = vsub.f32 %v84, %v220
    %v222 = vand.u32 %v221, 4294901760
    %v223 = vsub.f32 %v221, %v222
    %v224 = vand.u32 %v223, 4294901760
    %225 = vmatpush.msra.mxu0 %v224
    %v226 = vand.u32 %v83, 4294901760
    %v227 = vsub.f32 %v83, %v226
    %v228 = vand.u32 %v227, 4294901760
    %v229 = vsub.f32 %v227, %v228
    %v230 = vand.u32 %v229, 4294901760
    %231 = vmatpush.msra.mxu0 %v230
    %v232 = vand.u32 %v82, 4294901760
    %v233 = vsub.f32 %v82, %v232
    %v234 = vand.u32 %v233, 4294901760
    %v235 = vsub.f32 %v233, %v234
    %v236 = vand.u32 %v235, 4294901760
    %237 = vmatpush.msra.mxu0 %v236
    %v238 = vand.u32 %v81, 4294901760
    %v239 = vsub.f32 %v81, %v238
    %v240 = vand.u32 %v239, 4294901760
    %v241 = vsub.f32 %v239, %v240
    %v242 = vand.u32 %v241, 4294901760
    %243 = vmatpush.msra.mxu0 %v242
    %v244 = vand.u32 %v80, 4294901760
    %v245 = vsub.f32 %v80, %v244
    %v246 = vand.u32 %v245, 4294901760
    %v247 = vsub.f32 %v245, %v246
    %v248 = vand.u32 %v247, 4294901760
    %249 = vmatpush.msra.mxu0 %v248
    %v250 = vand.u32 %v79, 4294901760
    %v251 = vsub.f32 %v79, %v250
    %v252 = vand.u32 %v251, 4294901760
    %v253 = vsub.f32 %v251, %v252
    %v254 = vand.u32 %v253, 4294901760
    %255 = vmatpush.msra.mxu0 %v254
    %v256 = vand.u32 %v74, 4294901760
    %257 = vmatmul.f32.gmra.mxu0 %v256
    %v258 = vpop.f32.mrf.mxu0
    %v259 = vadd.f32 %v150, %v258
    %v260 = vand.u32 %v76, 4294901760
    %261 = vmatmul.f32.gmra.mxu0 %v260
    %v262 = vpop.f32.mrf.mxu0
    %v263 = vadd.f32 %v158, %v262
    %264 = vdwg.mxu0
    %v265 = vand.u32 %v94, 4294901760
    %v266 = vsub.f32 %v94, %v265
    %267 = vmatpush.msra.mxu0 %v266
    %v268 = vand.u32 %v93, 4294901760
    %v269 = vsub.f32 %v93, %v268
    %270 = vmatpush.msra.mxu0 %v269
    %v271 = vand.u32 %v92, 4294901760
    %v272 = vsub.f32 %v92, %v271
    %273 = vmatpush.msra.mxu0 %v272
    %v274 = vand.u32 %v91, 4294901760
    %v275 = vsub.f32 %v91, %v274
    %276 = vmatpush.msra.mxu0 %v275
    %v277 = vand.u32 %v90, 4294901760
    %v278 = vsub.f32 %v90, %v277
    %279 = vmatpush.msra.mxu0 %v278
    %v280 = vand.u32 %v89, 4294901760
    %v281 = vsub.f32 %v89, %v280
    %282 = vmatpush.msra.mxu0 %v281
    %v283 = vand.u32 %v88, 4294901760
    %v284 = vsub.f32 %v88, %v283
    %285 = vmatpush.msra.mxu0 %v284
    %v286 = vand.u32 %v87, 4294901760
    %v287 = vsub.f32 %v87, %v286
    %288 = vmatpush.msra.mxu0 %v287
    %v289 = vand.u32 %v86, 4294901760
    %v290 = vsub.f32 %v86, %v289
    %291 = vmatpush.msra.mxu0 %v290
    %v292 = vand.u32 %v85, 4294901760
    %v293 = vsub.f32 %v85, %v292
    %294 = vmatpush.msra.mxu0 %v293
    %v295 = vand.u32 %v84, 4294901760
    %v296 = vsub.f32 %v84, %v295
    %297 = vmatpush.msra.mxu0 %v296
    %v298 = vand.u32 %v83, 4294901760
    %v299 = vsub.f32 %v83, %v298
    %300 = vmatpush.msra.mxu0 %v299
    %v301 = vand.u32 %v82, 4294901760
    %v302 = vsub.f32 %v82, %v301
    %303 = vmatpush.msra.mxu0 %v302
    %v304 = vand.u32 %v81, 4294901760
    %v305 = vsub.f32 %v81, %v304
    %306 = vmatpush.msra.mxu0 %v305
    %v307 = vand.u32 %v80, 4294901760
    %v308 = vsub.f32 %v80, %v307
    %309 = vmatpush.msra.mxu0 %v308
    %v310 = vand.u32 %v79, 4294901760
    %v311 = vsub.f32 %v79, %v310
    %312 = vmatpush.msra.mxu0 %v311
    %v313 = vand.u32 %v74, 4294901760
    %v314 = vsub.f32 %v74, %v313
    %315 = vmatmul.f32.gmra.mxu0 %v314
    %v316 = vpop.f32.mrf.mxu0
    %v317 = vadd.f32 %v259, %v316
    %v318 = vand.u32 %v76, 4294901760
    %v319 = vsub.f32 %v76, %v318
    %320 = vmatmul.f32.gmra.mxu0 %v319
    %v321 = vpop.f32.mrf.mxu0
    %v322 = vadd.f32 %v263, %v321
    %323 = vdwg.mxu0
    %v324 = vand.u32 %v94, 4294901760
    %325 = vmatpush.msra.mxu0 %v324
    %v326 = vand.u32 %v93, 4294901760
    %327 = vmatpush.msra.mxu0 %v326
    %v328 = vand.u32 %v92, 4294901760
    %329 = vmatpush.msra.mxu0 %v328
    %v330 = vand.u32 %v91, 4294901760
    %331 = vmatpush.msra.mxu0 %v330
    %v332 = vand.u32 %v90, 4294901760
    %333 = vmatpush.msra.mxu0 %v332
    %v334 = vand.u32 %v89, 4294901760
    %335 = vmatpush.msra.mxu0 %v334
    %v336 = vand.u32 %v88, 4294901760
    %337 = vmatpush.msra.mxu0 %v336
    %v338 = vand.u32 %v87, 4294901760
    %339 = vmatpush.msra.mxu0 %v338
    %v340 = vand.u32 %v86, 4294901760
    %341 = vmatpush.msra.mxu0 %v340
    %v342 = vand.u32 %v85, 4294901760
    %343 = vmatpush.msra.mxu0 %v342
    %v344 = vand.u32 %v84, 4294901760
    %345 = vmatpush.msra.mxu0 %v344
    %v346 = vand.u32 %v83, 4294901760
    %347 = vmatpush.msra.mxu0 %v346
    %v348 = vand.u32 %v82, 4294901760
    %349 = vmatpush.msra.mxu0 %v348
    %v350 = vand.u32 %v81, 4294901760
    %351 = vmatpush.msra.mxu0 %v350
    %v352 = vand.u32 %v80, 4294901760
    %353 = vmatpush.msra.mxu0 %v352
    %v354 = vand.u32 %v79, 4294901760
    %355 = vmatpush.msra.mxu0 %v354
    %v356 = vand.u32 %v74, 4294901760
    %v357 = vsub.f32 %v74, %v356
    %v358 = vand.u32 %v357, 4294901760
    %359 = vmatmul.f32.gmra.mxu0 %v358
    %v360 = vpop.f32.mrf.mxu0
    %v361 = vadd.f32 %v317, %v360
    %v362 = vand.u32 %v76, 4294901760
    %v363 = vsub.f32 %v76, %v362
    %v364 = vand.u32 %v363, 4294901760
    %365 = vmatmul.f32.gmra.mxu0 %v364
    %v366 = vpop.f32.mrf.mxu0
    %v367 = vadd.f32 %v322, %v366
    %368 = vdwg.mxu0
    %v369 = vand.u32 %v94, 4294901760
    %v370 = vsub.f32 %v94, %v369
    %v371 = vand.u32 %v370, 4294901760
    %372 = vmatpush.msra.mxu0 %v371
    %v373 = vand.u32 %v93, 4294901760
    %v374 = vsub.f32 %v93, %v373
    %v375 = vand.u32 %v374, 4294901760
    %376 = vmatpush.msra.mxu0 %v375
    %v377 = vand.u32 %v92, 4294901760
    %v378 = vsub.f32 %v92, %v377
    %v379 = vand.u32 %v378, 4294901760
    %380 = vmatpush.msra.mxu0 %v379
    %v381 = vand.u32 %v91, 4294901760
    %v382 = vsub.f32 %v91, %v381
    %v383 = vand.u32 %v382, 4294901760
    %384 = vmatpush.msra.mxu0 %v383
    %v385 = vand.u32 %v90, 4294901760
    %v386 = vsub.f32 %v90, %v385
    %v387 = vand.u32 %v386, 4294901760
    %388 = vmatpush.msra.mxu0 %v387
    %v389 = vand.u32 %v89, 4294901760
    %v390 = vsub.f32 %v89, %v389
    %v391 = vand.u32 %v390, 4294901760
    %392 = vmatpush.msra.mxu0 %v391
    %v393 = vand.u32 %v88, 4294901760
    %v394 = vsub.f32 %v88, %v393
    %v395 = vand.u32 %v394, 4294901760
    %396 = vmatpush.msra.mxu0 %v395
    %v397 = vand.u32 %v87, 4294901760
    %v398 = vsub.f32 %v87, %v397
    %v399 = vand.u32 %v398, 4294901760
    %400 = vmatpush.msra.mxu0 %v399
    %v401 = vand.u32 %v86, 4294901760
    %v402 = vsub.f32 %v86, %v401
    %v403 = vand.u32 %v402, 4294901760
    %404 = vmatpush.msra.mxu0 %v403
    %v405 = vand.u32 %v85, 4294901760
    %v406 = vsub.f32 %v85, %v405
    %v407 = vand.u32 %v406, 4294901760
    %408 = vmatpush.msra.mxu0 %v407
    %v409 = vand.u32 %v84, 4294901760
    %v410 = vsub.f32 %v84, %v409
    %v411 = vand.u32 %v410, 4294901760
    %412 = vmatpush.msra.mxu0 %v411
    %v413 = vand.u32 %v83, 4294901760
    %v414 = vsub.f32 %v83, %v413
    %v415 = vand.u32 %v414, 4294901760
    %416 = vmatpush.msra.mxu0 %v415
    %v417 = vand.u32 %v82, 4294901760
    %v418 = vsub.f32 %v82, %v417
    %v419 = vand.u32 %v418, 4294901760
    %420 = vmatpush.msra.mxu0 %v419
    %v421 = vand.u32 %v81, 4294901760
    %v422 = vsub.f32 %v81, %v421
    %v423 = vand.u32 %v422, 4294901760
    %424 = vmatpush.msra.mxu0 %v423
    %v425 = vand.u32 %v80, 4294901760
    %v426 = vsub.f32 %v80, %v425
    %v427 = vand.u32 %v426, 4294901760
    %428 = vmatpush.msra.mxu0 %v427
    %v429 = vand.u32 %v79, 4294901760
    %v430 = vsub.f32 %v79, %v429
    %v431 = vand.u32 %v430, 4294901760
    %432 = vmatpush.msra.mxu0 %v431
    %v433 = vand.u32 %v74, 4294901760
    %434 = vmatmul.f32.gmra.mxu0 %v433
    %v435 = vpop.f32.mrf.mxu0
    %v436 = vadd.f32 %v361, %v435
    %v437 = vand.u32 %v76, 4294901760
    %438 = vmatmul.f32.gmra.mxu0 %v437
    %v439 = vpop.f32.mrf.mxu0
    %v440 = vadd.f32 %v367, %v439
    %441 = vdwg.mxu0
    %v442 = vand.u32 %v94, 4294901760
    %443 = vmatpush.msra.mxu0 %v442
    %v444 = vand.u32 %v93, 4294901760
    %445 = vmatpush.msra.mxu0 %v444
    %v446 = vand.u32 %v92, 4294901760
    %447 = vmatpush.msra.mxu0 %v446
    %v448 = vand.u32 %v91, 4294901760
    %449 = vmatpush.msra.mxu0 %v448
    %v450 = vand.u32 %v90, 4294901760
    %451 = vmatpush.msra.mxu0 %v450
    %v452 = vand.u32 %v89, 4294901760
    %453 = vmatpush.msra.mxu0 %v452
    %v454 = vand.u32 %v88, 4294901760
    %455 = vmatpush.msra.mxu0 %v454
    %v456 = vand.u32 %v87, 4294901760
    %457 = vmatpush.msra.mxu0 %v456
    %v458 = vand.u32 %v86, 4294901760
    %459 = vmatpush.msra.mxu0 %v458
    %v460 = vand.u32 %v85, 4294901760
    %461 = vmatpush.msra.mxu0 %v460
    %v462 = vand.u32 %v84, 4294901760
    %463 = vmatpush.msra.mxu0 %v462
    %v464 = vand.u32 %v83, 4294901760
    %465 = vmatpush.msra.mxu0 %v464
    %v466 = vand.u32 %v82, 4294901760
    %467 = vmatpush.msra.mxu0 %v466
    %v468 = vand.u32 %v81, 4294901760
    %469 = vmatpush.msra.mxu0 %v468
    %v470 = vand.u32 %v80, 4294901760
    %471 = vmatpush.msra.mxu0 %v470
    %v472 = vand.u32 %v79, 4294901760
    %473 = vmatpush.msra.mxu0 %v472
    %v474 = vand.u32 %v74, 4294901760
    %475 = vmatmul.f32.gmra.mxu0 %v474
    %v476 = vpop.f32.mrf.mxu0
    %v477 = vadd.f32 %v436, %v476
    %v478 = vand.u32 %v76, 4294901760
    %479 = vmatmul.f32.gmra.mxu0 %v478
    %v480 = vpop.f32.mrf.mxu0
    %v481 = vadd.f32 %v440, %v480
    %482 = vdwg.mxu0
    %v483 = vand.u32 %v110, 4294901760
    %484 = vmatpush.msra.mxu0 %v483
    %v485 = vand.u32 %v109, 4294901760
    %486 = vmatpush.msra.mxu0 %v485
    %v487 = vand.u32 %v108, 4294901760
    %488 = vmatpush.msra.mxu0 %v487
    %v489 = vand.u32 %v107, 4294901760
    %490 = vmatpush.msra.mxu0 %v489
    %v491 = vand.u32 %v106, 4294901760
    %492 = vmatpush.msra.mxu0 %v491
    %v493 = vand.u32 %v105, 4294901760
    %494 = vmatpush.msra.mxu0 %v493
    %v495 = vand.u32 %v104, 4294901760
    %496 = vmatpush.msra.mxu0 %v495
    %v497 = vand.u32 %v103, 4294901760
    %498 = vmatpush.msra.mxu0 %v497
    %v499 = vand.u32 %v102, 4294901760
    %500 = vmatpush.msra.mxu0 %v499
    %v501 = vand.u32 %v101, 4294901760
    %502 = vmatpush.msra.mxu0 %v501
    %v503 = vand.u32 %v100, 4294901760
    %504 = vmatpush.msra.mxu0 %v503
    %v505 = vand.u32 %v99, 4294901760
    %506 = vmatpush.msra.mxu0 %v505
    %v507 = vand.u32 %v98, 4294901760
    %508 = vmatpush.msra.mxu0 %v507
    %v509 = vand.u32 %v97, 4294901760
    %510 = vmatpush.msra.mxu0 %v509
    %v511 = vand.u32 %v96, 4294901760
    %512 = vmatpush.msra.mxu0 %v511
    %v513 = vand.u32 %v95, 4294901760
    %514 = vmatpush.msra.mxu0 %v513
    %v515 = vand.u32 %v75, 4294901760
    %v516 = vsub.f32 %v75, %v515
    %v517 = vand.u32 %v516, 4294901760
    %v518 = vsub.f32 %v516, %v517
    %v519 = vand.u32 %v518, 4294901760
    %520 = vmatmul.f32.gmra.mxu0 %v519
    %v521 = vpop.f32.mrf.mxu0
    %v522 = vadd.f32 %v477, %v521
    %v523 = vand.u32 %v77, 4294901760
    %v524 = vsub.f32 %v77, %v523
    %v525 = vand.u32 %v524, 4294901760
    %v526 = vsub.f32 %v524, %v525
    %v527 = vand.u32 %v526, 4294901760
    %528 = vmatmul.f32.gmra.mxu0 %v527
    %v529 = vpop.f32.mrf.mxu0
    %v530 = vadd.f32 %v481, %v529
    %531 = vdwg.mxu0
    %v532 = vand.u32 %v110, 4294901760
    %v533 = vsub.f32 %v110, %v532
    %v534 = vand.u32 %v533, 4294901760
    %v535 = vsub.f32 %v533, %v534
    %v536 = vand.u32 %v535, 4294901760
    %537 = vmatpush.msra.mxu0 %v536
    %v538 = vand.u32 %v109, 4294901760
    %v539 = vsub.f32 %v109, %v538
    %v540 = vand.u32 %v539, 4294901760
    %v541 = vsub.f32 %v539, %v540
    %v542 = vand.u32 %v541, 4294901760
    %543 = vmatpush.msra.mxu0 %v542
    %v544 = vand.u32 %v108, 4294901760
    %v545 = vsub.f32 %v108, %v544
    %v546 = vand.u32 %v545, 4294901760
    %v547 = vsub.f32 %v545, %v546
    %v548 = vand.u32 %v547, 4294901760
    %549 = vmatpush.msra.mxu0 %v548
    %v550 = vand.u32 %v107, 4294901760
    %v551 = vsub.f32 %v107, %v550
    %v552 = vand.u32 %v551, 4294901760
    %v553 = vsub.f32 %v551, %v552
    %v554 = vand.u32 %v553, 4294901760
    %555 = vmatpush.msra.mxu0 %v554
    %v556 = vand.u32 %v106, 4294901760
    %v557 = vsub.f32 %v106, %v556
    %v558 = vand.u32 %v557, 4294901760
    %v559 = vsub.f32 %v557, %v558
    %v560 = vand.u32 %v559, 4294901760
    %561 = vmatpush.msra.mxu0 %v560
    %v562 = vand.u32 %v105, 4294901760
    %v563 = vsub.f32 %v105, %v562
    %v564 = vand.u32 %v563, 4294901760
    %v565 = vsub.f32 %v563, %v564
    %v566 = vand.u32 %v565, 4294901760
    %567 = vmatpush.msra.mxu0 %v566
    %v568 = vand.u32 %v104, 4294901760
    %v569 = vsub.f32 %v104, %v568
    %v570 = vand.u32 %v569, 4294901760
    %v571 = vsub.f32 %v569, %v570
    %v572 = vand.u32 %v571, 4294901760
    %573 = vmatpush.msra.mxu0 %v572
    %v574 = vand.u32 %v103, 4294901760
    %v575 = vsub.f32 %v103, %v574
    %v576 = vand.u32 %v575, 4294901760
    %v577 = vsub.f32 %v575, %v576
    %v578 = vand.u32 %v577, 4294901760
    %579 = vmatpush.msra.mxu0 %v578
    %v580 = vand.u32 %v102, 4294901760
    %v581 = vsub.f32 %v102, %v580
    %v582 = vand.u32 %v581, 4294901760
    %v583 = vsub.f32 %v581, %v582
    %v584 = vand.u32 %v583, 4294901760
    %585 = vmatpush.msra.mxu0 %v584
    %v586 = vand.u32 %v101, 4294901760
    %v587 = vsub.f32 %v101, %v586
    %v588 = vand.u32 %v587, 4294901760
    %v589 = vsub.f32 %v587, %v588
    %v590 = vand.u32 %v589, 4294901760
    %591 = vmatpush.msra.mxu0 %v590
    %v592 = vand.u32 %v100, 4294901760
    %v593 = vsub.f32 %v100, %v592
    %v594 = vand.u32 %v593, 4294901760
    %v595 = vsub.f32 %v593, %v594
    %v596 = vand.u32 %v595, 4294901760
    %597 = vmatpush.msra.mxu0 %v596
    %v598 = vand.u32 %v99, 4294901760
    %v599 = vsub.f32 %v99, %v598
    %v600 = vand.u32 %v599, 4294901760
    %v601 = vsub.f32 %v599, %v600
    %v602 = vand.u32 %v601, 4294901760
    %603 = vmatpush.msra.mxu0 %v602
    %v604 = vand.u32 %v98, 4294901760
    %v605 = vsub.f32 %v98, %v604
    %v606 = vand.u32 %v605, 4294901760
    %v607 = vsub.f32 %v605, %v606
    %v608 = vand.u32 %v607, 4294901760
    %609 = vmatpush.msra.mxu0 %v608
    %v610 = vand.u32 %v97, 4294901760
    %v611 = vsub.f32 %v97, %v610
    %v612 = vand.u32 %v611, 4294901760
    %v613 = vsub.f32 %v611, %v612
    %v614 = vand.u32 %v613, 4294901760
    %615 = vmatpush.msra.mxu0 %v614
    %v616 = vand.u32 %v96, 4294901760
    %v617 = vsub.f32 %v96, %v616
    %v618 = vand.u32 %v617, 4294901760
    %v619 = vsub.f32 %v617, %v618
    %v620 = vand.u32 %v619, 4294901760
    %621 = vmatpush.msra.mxu0 %v620
    %v622 = vand.u32 %v95, 4294901760
    %v623 = vsub.f32 %v95, %v622
    %v624 = vand.u32 %v623, 4294901760
    %v625 = vsub.f32 %v623, %v624
    %v626 = vand.u32 %v625, 4294901760
    %627 = vmatpush.msra.mxu0 %v626
    %v628 = vand.u32 %v75, 4294901760
    %629 = vmatmul.f32.gmra.mxu0 %v628
    %v630 = vpop.f32.mrf.mxu0
    %v631 = vadd.f32 %v522, %v630
    %v632 = vand.u32 %v77, 4294901760
    %633 = vmatmul.f32.gmra.mxu0 %v632
    %v634 = vpop.f32.mrf.mxu0
    %v635 = vadd.f32 %v530, %v634
    %636 = vdwg.mxu0
    %v637 = vand.u32 %v110, 4294901760
    %v638 = vsub.f32 %v110, %v637
    %639 = vmatpush.msra.mxu0 %v638
    %v640 = vand.u32 %v109, 4294901760
    %v641 = vsub.f32 %v109, %v640
    %642 = vmatpush.msra.mxu0 %v641
    %v643 = vand.u32 %v108, 4294901760
    %v644 = vsub.f32 %v108, %v643
    %645 = vmatpush.msra.mxu0 %v644
    %v646 = vand.u32 %v107, 4294901760
    %v647 = vsub.f32 %v107, %v646
    %648 = vmatpush.msra.mxu0 %v647
    %v649 = vand.u32 %v106, 4294901760
    %v650 = vsub.f32 %v106, %v649
    %651 = vmatpush.msra.mxu0 %v650
    %v652 = vand.u32 %v105, 4294901760
    %v653 = vsub.f32 %v105, %v652
    %654 = vmatpush.msra.mxu0 %v653
    %v655 = vand.u32 %v104, 4294901760
    %v656 = vsub.f32 %v104, %v655
    %657 = vmatpush.msra.mxu0 %v656
    %v658 = vand.u32 %v103, 4294901760
    %v659 = vsub.f32 %v103, %v658
    %660 = vmatpush.msra.mxu0 %v659
    %v661 = vand.u32 %v102, 4294901760
    %v662 = vsub.f32 %v102, %v661
    %663 = vmatpush.msra.mxu0 %v662
    %v664 = vand.u32 %v101, 4294901760
    %v665 = vsub.f32 %v101, %v664
    %666 = vmatpush.msra.mxu0 %v665
    %v667 = vand.u32 %v100, 4294901760
    %v668 = vsub.f32 %v100, %v667
    %669 = vmatpush.msra.mxu0 %v668
    %v670 = vand.u32 %v99, 4294901760
    %v671 = vsub.f32 %v99, %v670
    %672 = vmatpush.msra.mxu0 %v671
    %v673 = vand.u32 %v98, 4294901760
    %v674 = vsub.f32 %v98, %v673
    %675 = vmatpush.msra.mxu0 %v674
    %v676 = vand.u32 %v97, 4294901760
    %v677 = vsub.f32 %v97, %v676
    %678 = vmatpush.msra.mxu0 %v677
    %v679 = vand.u32 %v96, 4294901760
    %v680 = vsub.f32 %v96, %v679
    %681 = vmatpush.msra.mxu0 %v680
    %v682 = vand.u32 %v95, 4294901760
    %v683 = vsub.f32 %v95, %v682
    %684 = vmatpush.msra.mxu0 %v683
    %v685 = vand.u32 %v75, 4294901760
    %v686 = vsub.f32 %v75, %v685
    %687 = vmatmul.f32.gmra.mxu0 %v686
    %v688 = vpop.f32.mrf.mxu0
    %v689 = vadd.f32 %v631, %v688
    %v690 = vand.u32 %v77, 4294901760
    %v691 = vsub.f32 %v77, %v690
    %692 = vmatmul.f32.gmra.mxu0 %v691
    %v693 = vpop.f32.mrf.mxu0
    %v694 = vadd.f32 %v635, %v693
    %695 = vdwg.mxu0
    %v696 = vand.u32 %v110, 4294901760
    %697 = vmatpush.msra.mxu0 %v696
    %v698 = vand.u32 %v109, 4294901760
    %699 = vmatpush.msra.mxu0 %v698
    %v700 = vand.u32 %v108, 4294901760
    %701 = vmatpush.msra.mxu0 %v700
    %v702 = vand.u32 %v107, 4294901760
    %703 = vmatpush.msra.mxu0 %v702
    %v704 = vand.u32 %v106, 4294901760
    %705 = vmatpush.msra.mxu0 %v704
    %v706 = vand.u32 %v105, 4294901760
    %707 = vmatpush.msra.mxu0 %v706
    %v708 = vand.u32 %v104, 4294901760
    %709 = vmatpush.msra.mxu0 %v708
    %v710 = vand.u32 %v103, 4294901760
    %711 = vmatpush.msra.mxu0 %v710
    %v712 = vand.u32 %v102, 4294901760
    %713 = vmatpush.msra.mxu0 %v712
    %v714 = vand.u32 %v101, 4294901760
    %715 = vmatpush.msra.mxu0 %v714
    %v716 = vand.u32 %v100, 4294901760
    %717 = vmatpush.msra.mxu0 %v716
    %v718 = vand.u32 %v99, 4294901760
    %719 = vmatpush.msra.mxu0 %v718
    %v720 = vand.u32 %v98, 4294901760
    %721 = vmatpush.msra.mxu0 %v720
    %v722 = vand.u32 %v97, 4294901760
    %723 = vmatpush.msra.mxu0 %v722
    %v724 = vand.u32 %v96, 4294901760
    %725 = vmatpush.msra.mxu0 %v724
    %v726 = vand.u32 %v95, 4294901760
    %727 = vmatpush.msra.mxu0 %v726
    %v728 = vand.u32 %v75, 4294901760
    %v729 = vsub.f32 %v75, %v728
    %v730 = vand.u32 %v729, 4294901760
    %731 = vmatmul.f32.gmra.mxu0 %v730
    %v732 = vpop.f32.mrf.mxu0
    %v733 = vadd.f32 %v689, %v732
    %v734 = vand.u32 %v77, 4294901760
    %v735 = vsub.f32 %v77, %v734
    %v736 = vand.u32 %v735, 4294901760
    %737 = vmatmul.f32.gmra.mxu0 %v736
    %v738 = vpop.f32.mrf.mxu0
    %v739 = vadd.f32 %v694, %v738
    %740 = vdwg.mxu0
    %v741 = vand.u32 %v110, 4294901760
    %v742 = vsub.f32 %v110, %v741
    %v743 = vand.u32 %v742, 4294901760
    %744 = vmatpush.msra.mxu0 %v743
    %v745 = vand.u32 %v109, 4294901760
    %v746 = vsub.f32 %v109, %v745
    %v747 = vand.u32 %v746, 4294901760
    %748 = vmatpush.msra.mxu0 %v747
    %v749 = vand.u32 %v108, 4294901760
    %v750 = vsub.f32 %v108, %v749
    %v751 = vand.u32 %v750, 4294901760
    %752 = vmatpush.msra.mxu0 %v751
    %v753 = vand.u32 %v107, 4294901760
    %v754 = vsub.f32 %v107, %v753
    %v755 = vand.u32 %v754, 4294901760
    %756 = vmatpush.msra.mxu0 %v755
    %v757 = vand.u32 %v106, 4294901760
    %v758 = vsub.f32 %v106, %v757
    %v759 = vand.u32 %v758, 4294901760
    %760 = vmatpush.msra.mxu0 %v759
    %v761 = vand.u32 %v105, 4294901760
    %v762 = vsub.f32 %v105, %v761
    %v763 = vand.u32 %v762, 4294901760
    %764 = vmatpush.msra.mxu0 %v763
    %v765 = vand.u32 %v104, 4294901760
    %v766 = vsub.f32 %v104, %v765
    %v767 = vand.u32 %v766, 4294901760
    %768 = vmatpush.msra.mxu0 %v767
    %v769 = vand.u32 %v103, 4294901760
    %v770 = vsub.f32 %v103, %v769
    %v771 = vand.u32 %v770, 4294901760
    %772 = vmatpush.msra.mxu0 %v771
    %v773 = vand.u32 %v102, 4294901760
    %v774 = vsub.f32 %v102, %v773
    %v775 = vand.u32 %v774, 4294901760
    %776 = vmatpush.msra.mxu0 %v775
    %v777 = vand.u32 %v101, 4294901760
    %v778 = vsub.f32 %v101, %v777
    %v779 = vand.u32 %v778, 4294901760
    %780 = vmatpush.msra.mxu0 %v779
    %v781 = vand.u32 %v100, 4294901760
    %v782 = vsub.f32 %v100, %v781
    %v783 = vand.u32 %v782, 4294901760
    %784 = vmatpush.msra.mxu0 %v783
    %v785 = vand.u32 %v99, 4294901760
    %v786 = vsub.f32 %v99, %v785
    %v787 = vand.u32 %v786, 4294901760
    %788 = vmatpush.msra.mxu0 %v787
    %v789 = vand.u32 %v98, 4294901760
    %v790 = vsub.f32 %v98, %v789
    %v791 = vand.u32 %v790, 4294901760
    %792 = vmatpush.msra.mxu0 %v791
    %v793 = vand.u32 %v97, 4294901760
    %v794 = vsub.f32 %v97, %v793
    %v795 = vand.u32 %v794, 4294901760
    %796 = vmatpush.msra.mxu0 %v795
    %v797 = vand.u32 %v96, 4294901760
    %v798 = vsub.f32 %v96, %v797
    %v799 = vand.u32 %v798, 4294901760
    %800 = vmatpush.msra.mxu0 %v799
    %v801 = vand.u32 %v95, 4294901760
    %v802 = vsub.f32 %v95, %v801
    %v803 = vand.u32 %v802, 4294901760
    %804 = vmatpush.msra.mxu0 %v803
    %v805 = vand.u32 %v75, 4294901760
    %806 = vmatmul.f32.gmra.mxu0 %v805
    %v807 = vpop.f32.mrf.mxu0
    %v808 = vadd.f32 %v733, %v807
    %v809 = vand.u32 %v77, 4294901760
    %810 = vmatmul.f32.gmra.mxu0 %v809
    %v811 = vpop.f32.mrf.mxu0
    %v812 = vadd.f32 %v739, %v811
    %813 = vdwg.mxu0
    %v814 = vand.u32 %v110, 4294901760
    %815 = vmatpush.msra.mxu0 %v814
    %v816 = vand.u32 %v109, 4294901760
    %817 = vmatpush.msra.mxu0 %v816
    %v818 = vand.u32 %v108, 4294901760
    %819 = vmatpush.msra.mxu0 %v818
    %v820 = vand.u32 %v107, 4294901760
    %821 = vmatpush.msra.mxu0 %v820
    %v822 = vand.u32 %v106, 4294901760
    %823 = vmatpush.msra.mxu0 %v822
    %v824 = vand.u32 %v105, 4294901760
    %825 = vmatpush.msra.mxu0 %v824
    %v826 = vand.u32 %v104, 4294901760
    %827 = vmatpush.msra.mxu0 %v826
    %v828 = vand.u32 %v103, 4294901760
    %829 = vmatpush.msra.mxu0 %v828
    %v830 = vand.u32 %v102, 4294901760
    %831 = vmatpush.msra.mxu0 %v830
    %v832 = vand.u32 %v101, 4294901760
    %833 = vmatpush.msra.mxu0 %v832
    %v834 = vand.u32 %v100, 4294901760
    %835 = vmatpush.msra.mxu0 %v834
    %v836 = vand.u32 %v99, 4294901760
    %837 = vmatpush.msra.mxu0 %v836
    %v838 = vand.u32 %v98, 4294901760
    %839 = vmatpush.msra.mxu0 %v838
    %v840 = vand.u32 %v97, 4294901760
    %841 = vmatpush.msra.mxu0 %v840
    %v842 = vand.u32 %v96, 4294901760
    %843 = vmatpush.msra.mxu0 %v842
    %v844 = vand.u32 %v95, 4294901760
    %845 = vmatpush.msra.mxu0 %v844
    %v846 = vand.u32 %v75, 4294901760
    %847 = vmatmul.f32.gmra.mxu0 %v846
    %v848 = vpop.f32.mrf.mxu0
    %v849 = vadd.f32 %v808, %v848
    %v850 = vand.u32 %v77, 4294901760
    %851 = vmatmul.f32.gmra.mxu0 %v850
    %v852 = vpop.f32.mrf.mxu0
    %v853 = vadd.f32 %v812, %v852
    %854 = vdwg.mxu0
    %v855 = vand.u32 %v56, 4294901760
    %856 = vmatpush.msra.mxu0 %v855
    %v857 = vand.u32 %v55, 4294901760
    %858 = vmatpush.msra.mxu0 %v857
    %v859 = vand.u32 %v54, 4294901760
    %860 = vmatpush.msra.mxu0 %v859
    %v861 = vand.u32 %v53, 4294901760
    %862 = vmatpush.msra.mxu0 %v861
    %v863 = vand.u32 %v52, 4294901760
    %864 = vmatpush.msra.mxu0 %v863
    %v865 = vand.u32 %v51, 4294901760
    %866 = vmatpush.msra.mxu0 %v865
    %v867 = vand.u32 %v50, 4294901760
    %868 = vmatpush.msra.mxu0 %v867
    %v869 = vand.u32 %v49, 4294901760
    %870 = vmatpush.msra.mxu0 %v869
    %v871 = vand.u32 %v48, 4294901760
    %872 = vmatpush.msra.mxu0 %v871
    %v873 = vand.u32 %v47, 4294901760
    %874 = vmatpush.msra.mxu0 %v873
    %v875 = vand.u32 %v46, 4294901760
    %876 = vmatpush.msra.mxu0 %v875
    %v877 = vand.u32 %v45, 4294901760
    %878 = vmatpush.msra.mxu0 %v877
    %v879 = vand.u32 %v44, 4294901760
    %880 = vmatpush.msra.mxu0 %v879
    %v881 = vand.u32 %v43, 4294901760
    %882 = vmatpush.msra.mxu0 %v881
    %v883 = vand.u32 %v42, 4294901760
    %884 = vmatpush.msra.mxu0 %v883
    %v885 = vand.u32 %v41, 4294901760
    %886 = vmatpush.msra.mxu0 %v885
    %v887 = vand.u32 %v37, 4294901760
    %v888 = vsub.f32 %v37, %v887
    %v889 = vand.u32 %v888, 4294901760
    %v890 = vsub.f32 %v888, %v889
    %v891 = vand.u32 %v890, 4294901760
    %892 = vmatmul.f32.gmra.mxu0 %v891
    %v893 = vpop.f32.mrf.mxu0
    %v894 = vadd.f32 %v849, %v893
    %v895 = vand.u32 %v39, 4294901760
    %v896 = vsub.f32 %v39, %v895
    %v897 = vand.u32 %v896, 4294901760
    %v898 = vsub.f32 %v896, %v897
    %v899 = vand.u32 %v898, 4294901760
    %900 = vmatmul.f32.gmra.mxu0 %v899
    %v901 = vpop.f32.mrf.mxu0
    %v902 = vadd.f32 %v853, %v901
    %903 = vdwg.mxu0
    %v904 = vand.u32 %v56, 4294901760
    %v905 = vsub.f32 %v56, %v904
    %v906 = vand.u32 %v905, 4294901760
    %v907 = vsub.f32 %v905, %v906
    %v908 = vand.u32 %v907, 4294901760
    %909 = vmatpush.msra.mxu0 %v908
    %v910 = vand.u32 %v55, 4294901760
    %v911 = vsub.f32 %v55, %v910
    %v912 = vand.u32 %v911, 4294901760
    %v913 = vsub.f32 %v911, %v912
    %v914 = vand.u32 %v913, 4294901760
    %915 = vmatpush.msra.mxu0 %v914
    %v916 = vand.u32 %v54, 4294901760
    %v917 = vsub.f32 %v54, %v916
    %v918 = vand.u32 %v917, 4294901760
    %v919 = vsub.f32 %v917, %v918
    %v920 = vand.u32 %v919, 4294901760
    %921 = vmatpush.msra.mxu0 %v920
    %v922 = vand.u32 %v53, 4294901760
    %v923 = vsub.f32 %v53, %v922
    %v924 = vand.u32 %v923, 4294901760
    %v925 = vsub.f32 %v923, %v924
    %v926 = vand.u32 %v925, 4294901760
    %927 = vmatpush.msra.mxu0 %v926
    %v928 = vand.u32 %v52, 4294901760
    %v929 = vsub.f32 %v52, %v928
    %v930 = vand.u32 %v929, 4294901760
    %v931 = vsub.f32 %v929, %v930
    %v932 = vand.u32 %v931, 4294901760
    %933 = vmatpush.msra.mxu0 %v932
    %v934 = vand.u32 %v51, 4294901760
    %v935 = vsub.f32 %v51, %v934
    %v936 = vand.u32 %v935, 4294901760
    %v937 = vsub.f32 %v935, %v936
    %v938 = vand.u32 %v937, 4294901760
    %939 = vmatpush.msra.mxu0 %v938
    %v940 = vand.u32 %v50, 4294901760
    %v941 = vsub.f32 %v50, %v940
    %v942 = vand.u32 %v941, 4294901760
    %v943 = vsub.f32 %v941, %v942
    %v944 = vand.u32 %v943, 4294901760
    %945 = vmatpush.msra.mxu0 %v944
    %v946 = vand.u32 %v49, 4294901760
    %v947 = vsub.f32 %v49, %v946
    %v948 = vand.u32 %v947, 4294901760
    %v949 = vsub.f32 %v947, %v948
    %v950 = vand.u32 %v949, 4294901760
    %951 = vmatpush.msra.mxu0 %v950
    %v952 = vand.u32 %v48, 4294901760
    %v953 = vsub.f32 %v48, %v952
    %v954 = vand.u32 %v953, 4294901760
    %v955 = vsub.f32 %v953, %v954
    %v956 = vand.u32 %v955, 4294901760
    %957 = vmatpush.msra.mxu0 %v956
    %v958 = vand.u32 %v47, 4294901760
    %v959 = vsub.f32 %v47, %v958
    %v960 = vand.u32 %v959, 4294901760
    %v961 = vsub.f32 %v959, %v960
    %v962 = vand.u32 %v961, 4294901760
    %963 = vmatpush.msra.mxu0 %v962
    %v964 = vand.u32 %v46, 4294901760
    %v965 = vsub.f32 %v46, %v964
    %v966 = vand.u32 %v965, 4294901760
    %v967 = vsub.f32 %v965, %v966
    %v968 = vand.u32 %v967, 4294901760
    %969 = vmatpush.msra.mxu0 %v968
    %v970 = vand.u32 %v45, 4294901760
    %v971 = vsub.f32 %v45, %v970
    %v972 = vand.u32 %v971, 4294901760
    %v973 = vsub.f32 %v971, %v972
    %v974 = vand.u32 %v973, 4294901760
    %975 = vmatpush.msra.mxu0 %v974
    %v976 = vand.u32 %v44, 4294901760
    %v977 = vsub.f32 %v44, %v976
    %v978 = vand.u32 %v977, 4294901760
    %v979 = vsub.f32 %v977, %v978
    %v980 = vand.u32 %v979, 4294901760
    %981 = vmatpush.msra.mxu0 %v980
    %v982 = vand.u32 %v43, 4294901760
    %v983 = vsub.f32 %v43, %v982
    %v984 = vand.u32 %v983, 4294901760
    %v985 = vsub.f32 %v983, %v984
    %v986 = vand.u32 %v985, 4294901760
    %987 = vmatpush.msra.mxu0 %v986
    %v988 = vand.u32 %v42, 4294901760
    %v989 = vsub.f32 %v42, %v988
    %v990 = vand.u32 %v989, 4294901760
    %v991 = vsub.f32 %v989, %v990
    %v992 = vand.u32 %v991, 4294901760
    %993 = vmatpush.msra.mxu0 %v992
    %v994 = vand.u32 %v41, 4294901760
    %v995 = vsub.f32 %v41, %v994
    %v996 = vand.u32 %v995, 4294901760
    %v997 = vsub.f32 %v995, %v996
    %v998 = vand.u32 %v997, 4294901760
    %999 = vmatpush.msra.mxu0 %v998
    %v1000 = vand.u32 %v37, 4294901760
    %1001 = vmatmul.f32.gmra.mxu0 %v1000
    %v1002 = vpop.f32.mrf.mxu0
    %v1003 = vadd.f32 %v894, %v1002
    %v1004 = vand.u32 %v39, 4294901760
    %1005 = vmatmul.f32.gmra.mxu0 %v1004
    %v1006 = vpop.f32.mrf.mxu0
    %v1007 = vadd.f32 %v902, %v1006
    %1008 = vdwg.mxu0
    %v1009 = vand.u32 %v56, 4294901760
    %v1010 = vsub.f32 %v56, %v1009
    %1011 = vmatpush.msra.mxu0 %v1010
    %v1012 = vand.u32 %v55, 4294901760
    %v1013 = vsub.f32 %v55, %v1012
    %1014 = vmatpush.msra.mxu0 %v1013
    %v1015 = vand.u32 %v54, 4294901760
    %v1016 = vsub.f32 %v54, %v1015
    %1017 = vmatpush.msra.mxu0 %v1016
    %v1018 = vand.u32 %v53, 4294901760
    %v1019 = vsub.f32 %v53, %v1018
    %1020 = vmatpush.msra.mxu0 %v1019
    %v1021 = vand.u32 %v52, 4294901760
    %v1022 = vsub.f32 %v52, %v1021
    %1023 = vmatpush.msra.mxu0 %v1022
    %v1024 = vand.u32 %v51, 4294901760
    %v1025 = vsub.f32 %v51, %v1024
    %1026 = vmatpush.msra.mxu0 %v1025
    %v1027 = vand.u32 %v50, 4294901760
    %v1028 = vsub.f32 %v50, %v1027
    %1029 = vmatpush.msra.mxu0 %v1028
    %v1030 = vand.u32 %v49, 4294901760
    %v1031 = vsub.f32 %v49, %v1030
    %1032 = vmatpush.msra.mxu0 %v1031
    %v1033 = vand.u32 %v48, 4294901760
    %v1034 = vsub.f32 %v48, %v1033
    %1035 = vmatpush.msra.mxu0 %v1034
    %v1036 = vand.u32 %v47, 4294901760
    %v1037 = vsub.f32 %v47, %v1036
    %1038 = vmatpush.msra.mxu0 %v1037
    %v1039 = vand.u32 %v46, 4294901760
    %v1040 = vsub.f32 %v46, %v1039
    %1041 = vmatpush.msra.mxu0 %v1040
    %v1042 = vand.u32 %v45, 4294901760
    %v1043 = vsub.f32 %v45, %v1042
    %1044 = vmatpush.msra.mxu0 %v1043
    %v1045 = vand.u32 %v44, 4294901760
    %v1046 = vsub.f32 %v44, %v1045
    %1047 = vmatpush.msra.mxu0 %v1046
    %v1048 = vand.u32 %v43, 4294901760
    %v1049 = vsub.f32 %v43, %v1048
    %1050 = vmatpush.msra.mxu0 %v1049
    %v1051 = vand.u32 %v42, 4294901760
    %v1052 = vsub.f32 %v42, %v1051
    %1053 = vmatpush.msra.mxu0 %v1052
    %v1054 = vand.u32 %v41, 4294901760
    %v1055 = vsub.f32 %v41, %v1054
    %1056 = vmatpush.msra.mxu0 %v1055
    %v1057 = vand.u32 %v37, 4294901760
    %v1058 = vsub.f32 %v37, %v1057
    %1059 = vmatmul.f32.gmra.mxu0 %v1058
    %v1060 = vpop.f32.mrf.mxu0
    %v1061 = vadd.f32 %v1003, %v1060
    %v1062 = vand.u32 %v39, 4294901760
    %v1063 = vsub.f32 %v39, %v1062
    %1064 = vmatmul.f32.gmra.mxu0 %v1063
    %v1065 = vpop.f32.mrf.mxu0
    %v1066 = vadd.f32 %v1007, %v1065
    %1067 = vdwg.mxu0
    %v1068 = vand.u32 %v56, 4294901760
    %1069 = vmatpush.msra.mxu0 %v1068
    %v1070 = vand.u32 %v55, 4294901760
    %1071 = vmatpush.msra.mxu0 %v1070
    %v1072 = vand.u32 %v54, 4294901760
    %1073 = vmatpush.msra.mxu0 %v1072
    %v1074 = vand.u32 %v53, 4294901760
    %1075 = vmatpush.msra.mxu0 %v1074
    %v1076 = vand.u32 %v52, 4294901760
    %1077 = vmatpush.msra.mxu0 %v1076
    %v1078 = vand.u32 %v51, 4294901760
    %1079 = vmatpush.msra.mxu0 %v1078
    %v1080 = vand.u32 %v50, 4294901760
    %1081 = vmatpush.msra.mxu0 %v1080
    %v1082 = vand.u32 %v49, 4294901760
    %1083 = vmatpush.msra.mxu0 %v1082
    %v1084 = vand.u32 %v48, 4294901760
    %1085 = vmatpush.msra.mxu0 %v1084
    %v1086 = vand.u32 %v47, 4294901760
    %1087 = vmatpush.msra.mxu0 %v1086
    %v1088 = vand.u32 %v46, 4294901760
    %1089 = vmatpush.msra.mxu0 %v1088
    %v1090 = vand.u32 %v45, 4294901760
    %1091 = vmatpush.msra.mxu0 %v1090
    %v1092 = vand.u32 %v44, 4294901760
    %1093 = vmatpush.msra.mxu0 %v1092
    %v1094 = vand.u32 %v43, 4294901760
    %1095 = vmatpush.msra.mxu0 %v1094
    %v1096 = vand.u32 %v42, 4294901760
    %1097 = vmatpush.msra.mxu0 %v1096
    %v1098 = vand.u32 %v41, 4294901760
    %1099 = vmatpush.msra.mxu0 %v1098
    %v1100 = vand.u32 %v37, 4294901760
    %v1101 = vsub.f32 %v37, %v1100
    %v1102 = vand.u32 %v1101, 4294901760
    %1103 = vmatmul.f32.gmra.mxu0 %v1102
    %v1104 = vpop.f32.mrf.mxu0
    %v1105 = vadd.f32 %v1061, %v1104
    %v1106 = vand.u32 %v39, 4294901760
    %v1107 = vsub.f32 %v39, %v1106
    %v1108 = vand.u32 %v1107, 4294901760
    %1109 = vmatmul.f32.gmra.mxu0 %v1108
    %v1110 = vpop.f32.mrf.mxu0
    %v1111 = vadd.f32 %v1066, %v1110
    %1112 = vdwg.mxu0
    %v1113 = vand.u32 %v56, 4294901760
    %v1114 = vsub.f32 %v56, %v1113
    %v1115 = vand.u32 %v1114, 4294901760
    %1116 = vmatpush.msra.mxu0 %v1115
    %v1117 = vand.u32 %v55, 4294901760
    %v1118 = vsub.f32 %v55, %v1117
    %v1119 = vand.u32 %v1118, 4294901760
    %1120 = vmatpush.msra.mxu0 %v1119
    %v1121 = vand.u32 %v54, 4294901760
    %v1122 = vsub.f32 %v54, %v1121
    %v1123 = vand.u32 %v1122, 4294901760
    %1124 = vmatpush.msra.mxu0 %v1123
    %v1125 = vand.u32 %v53, 4294901760
    %v1126 = vsub.f32 %v53, %v1125
    %v1127 = vand.u32 %v1126, 4294901760
    %1128 = vmatpush.msra.mxu0 %v1127
    %v1129 = vand.u32 %v52, 4294901760
    %v1130 = vsub.f32 %v52, %v1129
    %v1131 = vand.u32 %v1130, 4294901760
    %1132 = vmatpush.msra.mxu0 %v1131
    %v1133 = vand.u32 %v51, 4294901760
    %v1134 = vsub.f32 %v51, %v1133
    %v1135 = vand.u32 %v1134, 4294901760
    %1136 = vmatpush.msra.mxu0 %v1135
    %v1137 = vand.u32 %v50, 4294901760
    %v1138 = vsub.f32 %v50, %v1137
    %v1139 = vand.u32 %v1138, 4294901760
    %1140 = vmatpush.msra.mxu0 %v1139
    %v1141 = vand.u32 %v49, 4294901760
    %v1142 = vsub.f32 %v49, %v1141
    %v1143 = vand.u32 %v1142, 4294901760
    %1144 = vmatpush.msra.mxu0 %v1143
    %v1145 = vand.u32 %v48, 4294901760
    %v1146 = vsub.f32 %v48, %v1145
    %v1147 = vand.u32 %v1146, 4294901760
    %1148 = vmatpush.msra.mxu0 %v1147
    %v1149 = vand.u32 %v47, 4294901760
    %v1150 = vsub.f32 %v47, %v1149
    %v1151 = vand.u32 %v1150, 4294901760
    %1152 = vmatpush.msra.mxu0 %v1151
    %v1153 = vand.u32 %v46, 4294901760
    %v1154 = vsub.f32 %v46, %v1153
    %v1155 = vand.u32 %v1154, 4294901760
    %1156 = vmatpush.msra.mxu0 %v1155
    %v1157 = vand.u32 %v45, 4294901760
    %v1158 = vsub.f32 %v45, %v1157
    %v1159 = vand.u32 %v1158, 4294901760
    %1160 = vmatpush.msra.mxu0 %v1159
    %v1161 = vand.u32 %v44, 4294901760
    %v1162 = vsub.f32 %v44, %v1161
    %v1163 = vand.u32 %v1162, 4294901760
    %1164 = vmatpush.msra.mxu0 %v1163
    %v1165 = vand.u32 %v43, 4294901760
    %v1166 = vsub.f32 %v43, %v1165
    %v1167 = vand.u32 %v1166, 4294901760
    %1168 = vmatpush.msra.mxu0 %v1167
    %v1169 = vand.u32 %v42, 4294901760
    %v1170 = vsub.f32 %v42, %v1169
    %v1171 = vand.u32 %v1170, 4294901760
    %1172 = vmatpush.msra.mxu0 %v1171
    %v1173 = vand.u32 %v41, 4294901760
    %v1174 = vsub.f32 %v41, %v1173
    %v1175 = vand.u32 %v1174, 4294901760
    %1176 = vmatpush.msra.mxu0 %v1175
    %v1177 = vand.u32 %v37, 4294901760
    %1178 = vmatmul.f32.gmra.mxu0 %v1177
    %v1179 = vpop.f32.mrf.mxu0
    %v1180 = vadd.f32 %v1105, %v1179
    %v1181 = vand.u32 %v39, 4294901760
    %1182 = vmatmul.f32.gmra.mxu0 %v1181
    %v1183 = vpop.f32.mrf.mxu0
    %v1184 = vadd.f32 %v1111, %v1183
    %1185 = vdwg.mxu0
    %v1186 = vand.u32 %v56, 4294901760
    %1187 = vmatpush.msra.mxu0 %v1186
    %v1188 = vand.u32 %v55, 4294901760
    %1189 = vmatpush.msra.mxu0 %v1188
    %v1190 = vand.u32 %v54, 4294901760
    %1191 = vmatpush.msra.mxu0 %v1190
    %v1192 = vand.u32 %v53, 4294901760
    %1193 = vmatpush.msra.mxu0 %v1192
    %v1194 = vand.u32 %v52, 4294901760
    %1195 = vmatpush.msra.mxu0 %v1194
    %v1196 = vand.u32 %v51, 4294901760
    %1197 = vmatpush.msra.mxu0 %v1196
    %v1198 = vand.u32 %v50, 4294901760
    %1199 = vmatpush.msra.mxu0 %v1198
    %v1200 = vand.u32 %v49, 4294901760
    %1201 = vmatpush.msra.mxu0 %v1200
    %v1202 = vand.u32 %v48, 4294901760
    %1203 = vmatpush.msra.mxu0 %v1202
    %v1204 = vand.u32 %v47, 4294901760
    %1205 = vmatpush.msra.mxu0 %v1204
    %v1206 = vand.u32 %v46, 4294901760
    %1207 = vmatpush.msra.mxu0 %v1206
    %v1208 = vand.u32 %v45, 4294901760
    %1209 = vmatpush.msra.mxu0 %v1208
    %v1210 = vand.u32 %v44, 4294901760
    %1211 = vmatpush.msra.mxu0 %v1210
    %v1212 = vand.u32 %v43, 4294901760
    %1213 = vmatpush.msra.mxu0 %v1212
    %v1214 = vand.u32 %v42, 4294901760
    %1215 = vmatpush.msra.mxu0 %v1214
    %v1216 = vand.u32 %v41, 4294901760
    %1217 = vmatpush.msra.mxu0 %v1216
    %v1218 = vand.u32 %v37, 4294901760
    %1219 = vmatmul.f32.gmra.mxu0 %v1218
    %v1220 = vpop.f32.mrf.mxu0
    %v1221 = vadd.f32 %v1180, %v1220
    %v1222 = vand.u32 %v39, 4294901760
    %1223 = vmatmul.f32.gmra.mxu0 %v1222
    %v1224 = vpop.f32.mrf.mxu0
    %v1225 = vadd.f32 %v1184, %v1224
    %1226 = vdwg.mxu0
    %v1227 = vand.u32 %v72, 4294901760
    %1228 = vmatpush.msra.mxu0 %v1227
    %v1229 = vand.u32 %v71, 4294901760
    %1230 = vmatpush.msra.mxu0 %v1229
    %v1231 = vand.u32 %v70, 4294901760
    %1232 = vmatpush.msra.mxu0 %v1231
    %v1233 = vand.u32 %v69, 4294901760
    %1234 = vmatpush.msra.mxu0 %v1233
    %v1235 = vand.u32 %v68, 4294901760
    %1236 = vmatpush.msra.mxu0 %v1235
    %v1237 = vand.u32 %v67, 4294901760
    %1238 = vmatpush.msra.mxu0 %v1237
    %v1239 = vand.u32 %v66, 4294901760
    %1240 = vmatpush.msra.mxu0 %v1239
    %v1241 = vand.u32 %v65, 4294901760
    %1242 = vmatpush.msra.mxu0 %v1241
    %v1243 = vand.u32 %v64, 4294901760
    %1244 = vmatpush.msra.mxu0 %v1243
    %v1245 = vand.u32 %v63, 4294901760
    %1246 = vmatpush.msra.mxu0 %v1245
    %v1247 = vand.u32 %v62, 4294901760
    %1248 = vmatpush.msra.mxu0 %v1247
    %v1249 = vand.u32 %v61, 4294901760
    %1250 = vmatpush.msra.mxu0 %v1249
    %v1251 = vand.u32 %v60, 4294901760
    %1252 = vmatpush.msra.mxu0 %v1251
    %v1253 = vand.u32 %v59, 4294901760
    %1254 = vmatpush.msra.mxu0 %v1253
    %v1255 = vand.u32 %v58, 4294901760
    %1256 = vmatpush.msra.mxu0 %v1255
    %v1257 = vand.u32 %v57, 4294901760
    %1258 = vmatpush.msra.mxu0 %v1257
    %v1259 = vand.u32 %v38, 4294901760
    %v1260 = vsub.f32 %v38, %v1259
    %v1261 = vand.u32 %v1260, 4294901760
    %v1262 = vsub.f32 %v1260, %v1261
    %v1263 = vand.u32 %v1262, 4294901760
    %1264 = vmatmul.f32.gmra.mxu0 %v1263
    %v1265 = vpop.f32.mrf.mxu0
    %v1266 = vadd.f32 %v1221, %v1265
    %v1267 = vand.u32 %v40, 4294901760
    %v1268 = vsub.f32 %v40, %v1267
    %v1269 = vand.u32 %v1268, 4294901760
    %v1270 = vsub.f32 %v1268, %v1269
    %v1271 = vand.u32 %v1270, 4294901760
    %1272 = vmatmul.f32.gmra.mxu0 %v1271
    %v1273 = vpop.f32.mrf.mxu0
    %v1274 = vadd.f32 %v1225, %v1273
    %1275 = vdwg.mxu0
    %v1276 = vand.u32 %v72, 4294901760
    %v1277 = vsub.f32 %v72, %v1276
    %v1278 = vand.u32 %v1277, 4294901760
    %v1279 = vsub.f32 %v1277, %v1278
    %v1280 = vand.u32 %v1279, 4294901760
    %1281 = vmatpush.msra.mxu0 %v1280
    %v1282 = vand.u32 %v71, 4294901760
    %v1283 = vsub.f32 %v71, %v1282
    %v1284 = vand.u32 %v1283, 4294901760
    %v1285 = vsub.f32 %v1283, %v1284
    %v1286 = vand.u32 %v1285, 4294901760
    %1287 = vmatpush.msra.mxu0 %v1286
    %v1288 = vand.u32 %v70, 4294901760
    %v1289 = vsub.f32 %v70, %v1288
    %v1290 = vand.u32 %v1289, 4294901760
    %v1291 = vsub.f32 %v1289, %v1290
    %v1292 = vand.u32 %v1291, 4294901760
    %1293 = vmatpush.msra.mxu0 %v1292
    %v1294 = vand.u32 %v69, 4294901760
    %v1295 = vsub.f32 %v69, %v1294
    %v1296 = vand.u32 %v1295, 4294901760
    %v1297 = vsub.f32 %v1295, %v1296
    %v1298 = vand.u32 %v1297, 4294901760
    %1299 = vmatpush.msra.mxu0 %v1298
    %v1300 = vand.u32 %v68, 4294901760
    %v1301 = vsub.f32 %v68, %v1300
    %v1302 = vand.u32 %v1301, 4294901760
    %v1303 = vsub.f32 %v1301, %v1302
    %v1304 = vand.u32 %v1303, 4294901760
    %1305 = vmatpush.msra.mxu0 %v1304
    %v1306 = vand.u32 %v67, 4294901760
    %v1307 = vsub.f32 %v67, %v1306
    %v1308 = vand.u32 %v1307, 4294901760
    %v1309 = vsub.f32 %v1307, %v1308
    %v1310 = vand.u32 %v1309, 4294901760
    %1311 = vmatpush.msra.mxu0 %v1310
    %v1312 = vand.u32 %v66, 4294901760
    %v1313 = vsub.f32 %v66, %v1312
    %v1314 = vand.u32 %v1313, 4294901760
    %v1315 = vsub.f32 %v1313, %v1314
    %v1316 = vand.u32 %v1315, 4294901760
    %1317 = vmatpush.msra.mxu0 %v1316
    %v1318 = vand.u32 %v65, 4294901760
    %v1319 = vsub.f32 %v65, %v1318
    %v1320 = vand.u32 %v1319, 4294901760
    %v1321 = vsub.f32 %v1319, %v1320
    %v1322 = vand.u32 %v1321, 4294901760
    %1323 = vmatpush.msra.mxu0 %v1322
    %v1324 = vand.u32 %v64, 4294901760
    %v1325 = vsub.f32 %v64, %v1324
    %v1326 = vand.u32 %v1325, 4294901760
    %v1327 = vsub.f32 %v1325, %v1326
    %v1328 = vand.u32 %v1327, 4294901760
    %1329 = vmatpush.msra.mxu0 %v1328
    %v1330 = vand.u32 %v63, 4294901760
    %v1331 = vsub.f32 %v63, %v1330
    %v1332 = vand.u32 %v1331, 4294901760
    %v1333 = vsub.f32 %v1331, %v1332
    %v1334 = vand.u32 %v1333, 4294901760
    %1335 = vmatpush.msra.mxu0 %v1334
    %v1336 = vand.u32 %v62, 4294901760
    %v1337 = vsub.f32 %v62, %v1336
    %v1338 = vand.u32 %v1337, 4294901760
    %v1339 = vsub.f32 %v1337, %v1338
    %v1340 = vand.u32 %v1339, 4294901760
    %1341 = vmatpush.msra.mxu0 %v1340
    %v1342 = vand.u32 %v61, 4294901760
    %v1343 = vsub.f32 %v61, %v1342
    %v1344 = vand.u32 %v1343, 4294901760
    %v1345 = vsub.f32 %v1343, %v1344
    %v1346 = vand.u32 %v1345, 4294901760
    %1347 = vmatpush.msra.mxu0 %v1346
    %v1348 = vand.u32 %v60, 4294901760
    %v1349 = vsub.f32 %v60, %v1348
    %v1350 = vand.u32 %v1349, 4294901760
    %v1351 = vsub.f32 %v1349, %v1350
    %v1352 = vand.u32 %v1351, 4294901760
    %1353 = vmatpush.msra.mxu0 %v1352
    %v1354 = vand.u32 %v59, 4294901760
    %v1355 = vsub.f32 %v59, %v1354
    %v1356 = vand.u32 %v1355, 4294901760
    %v1357 = vsub.f32 %v1355, %v1356
    %v1358 = vand.u32 %v1357, 4294901760
    %1359 = vmatpush.msra.mxu0 %v1358
    %v1360 = vand.u32 %v58, 4294901760
    %v1361 = vsub.f32 %v58, %v1360
    %v1362 = vand.u32 %v1361, 4294901760
    %v1363 = vsub.f32 %v1361, %v1362
    %v1364 = vand.u32 %v1363, 4294901760
    %1365 = vmatpush.msra.mxu0 %v1364
    %v1366 = vand.u32 %v57, 4294901760
    %v1367 = vsub.f32 %v57, %v1366
    %v1368 = vand.u32 %v1367, 4294901760
    %v1369 = vsub.f32 %v1367, %v1368
    %v1370 = vand.u32 %v1369, 4294901760
    %1371 = vmatpush.msra.mxu0 %v1370
    %v1372 = vand.u32 %v38, 4294901760
    %1373 = vmatmul.f32.gmra.mxu0 %v1372
    %v1374 = vpop.f32.mrf.mxu0
    %v1375 = vadd.f32 %v1266, %v1374
    %v1376 = vand.u32 %v40, 4294901760
    %1377 = vmatmul.f32.gmra.mxu0 %v1376
    %v1378 = vpop.f32.mrf.mxu0
    %v1379 = vadd.f32 %v1274, %v1378
    %1380 = vdwg.mxu0
    %v1381 = vand.u32 %v72, 4294901760
    %v1382 = vsub.f32 %v72, %v1381
    %1383 = vmatpush.msra.mxu0 %v1382
    %v1384 = vand.u32 %v71, 4294901760
    %v1385 = vsub.f32 %v71, %v1384
    %1386 = vmatpush.msra.mxu0 %v1385
    %v1387 = vand.u32 %v70, 4294901760
    %v1388 = vsub.f32 %v70, %v1387
    %1389 = vmatpush.msra.mxu0 %v1388
    %v1390 = vand.u32 %v69, 4294901760
    %v1391 = vsub.f32 %v69, %v1390
    %1392 = vmatpush.msra.mxu0 %v1391
    %v1393 = vand.u32 %v68, 4294901760
    %v1394 = vsub.f32 %v68, %v1393
    %1395 = vmatpush.msra.mxu0 %v1394
    %v1396 = vand.u32 %v67, 4294901760
    %v1397 = vsub.f32 %v67, %v1396
    %1398 = vmatpush.msra.mxu0 %v1397
    %v1399 = vand.u32 %v66, 4294901760
    %v1400 = vsub.f32 %v66, %v1399
    %1401 = vmatpush.msra.mxu0 %v1400
    %v1402 = vand.u32 %v65, 4294901760
    %v1403 = vsub.f32 %v65, %v1402
    %1404 = vmatpush.msra.mxu0 %v1403
    %v1405 = vand.u32 %v64, 4294901760
    %v1406 = vsub.f32 %v64, %v1405
    %1407 = vmatpush.msra.mxu0 %v1406
    %v1408 = vand.u32 %v63, 4294901760
    %v1409 = vsub.f32 %v63, %v1408
    %1410 = vmatpush.msra.mxu0 %v1409
    %v1411 = vand.u32 %v62, 4294901760
    %v1412 = vsub.f32 %v62, %v1411
    %1413 = vmatpush.msra.mxu0 %v1412
    %v1414 = vand.u32 %v61, 4294901760
    %v1415 = vsub.f32 %v61, %v1414
    %1416 = vmatpush.msra.mxu0 %v1415
    %v1417 = vand.u32 %v60, 4294901760
    %v1418 = vsub.f32 %v60, %v1417
    %1419 = vmatpush.msra.mxu0 %v1418
    %v1420 = vand.u32 %v59, 4294901760
    %v1421 = vsub.f32 %v59, %v1420
    %1422 = vmatpush.msra.mxu0 %v1421
    %v1423 = vand.u32 %v58, 4294901760
    %v1424 = vsub.f32 %v58, %v1423
    %1425 = vmatpush.msra.mxu0 %v1424
    %v1426 = vand.u32 %v57, 4294901760
    %v1427 = vsub.f32 %v57, %v1426
    %1428 = vmatpush.msra.mxu0 %v1427
    %v1429 = vand.u32 %v38, 4294901760
    %v1430 = vsub.f32 %v38, %v1429
    %1431 = vmatmul.f32.gmra.mxu0 %v1430
    %v1432 = vpop.f32.mrf.mxu0
    %v1433 = vadd.f32 %v1375, %v1432
    %v1434 = vand.u32 %v40, 4294901760
    %v1435 = vsub.f32 %v40, %v1434
    %1436 = vmatmul.f32.gmra.mxu0 %v1435
    %v1437 = vpop.f32.mrf.mxu0
    %v1438 = vadd.f32 %v1379, %v1437
    %1439 = vdwg.mxu0
    %v1440 = vand.u32 %v72, 4294901760
    %1441 = vmatpush.msra.mxu0 %v1440
    %v1442 = vand.u32 %v71, 4294901760
    %1443 = vmatpush.msra.mxu0 %v1442
    %v1444 = vand.u32 %v70, 4294901760
    %1445 = vmatpush.msra.mxu0 %v1444
    %v1446 = vand.u32 %v69, 4294901760
    %1447 = vmatpush.msra.mxu0 %v1446
    %v1448 = vand.u32 %v68, 4294901760
    %1449 = vmatpush.msra.mxu0 %v1448
    %v1450 = vand.u32 %v67, 4294901760
    %1451 = vmatpush.msra.mxu0 %v1450
    %v1452 = vand.u32 %v66, 4294901760
    %1453 = vmatpush.msra.mxu0 %v1452
    %v1454 = vand.u32 %v65, 4294901760
    %1455 = vmatpush.msra.mxu0 %v1454
    %v1456 = vand.u32 %v64, 4294901760
    %1457 = vmatpush.msra.mxu0 %v1456
    %v1458 = vand.u32 %v63, 4294901760
    %1459 = vmatpush.msra.mxu0 %v1458
    %v1460 = vand.u32 %v62, 4294901760
    %1461 = vmatpush.msra.mxu0 %v1460
    %v1462 = vand.u32 %v61, 4294901760
    %1463 = vmatpush.msra.mxu0 %v1462
    %v1464 = vand.u32 %v60, 4294901760
    %1465 = vmatpush.msra.mxu0 %v1464
    %v1466 = vand.u32 %v59, 4294901760
    %1467 = vmatpush.msra.mxu0 %v1466
    %v1468 = vand.u32 %v58, 4294901760
    %1469 = vmatpush.msra.mxu0 %v1468
    %v1470 = vand.u32 %v57, 4294901760
    %1471 = vmatpush.msra.mxu0 %v1470
    %v1472 = vand.u32 %v38, 4294901760
    %v1473 = vsub.f32 %v38, %v1472
    %v1474 = vand.u32 %v1473, 4294901760
    %1475 = vmatmul.f32.gmra.mxu0 %v1474
    %v1476 = vpop.f32.mrf.mxu0
    %v1477 = vadd.f32 %v1433, %v1476
    %v1478 = vand.u32 %v40, 4294901760
    %v1479 = vsub.f32 %v40, %v1478
    %v1480 = vand.u32 %v1479, 4294901760
    %1481 = vmatmul.f32.gmra.mxu0 %v1480
    %v1482 = vpop.f32.mrf.mxu0
    %v1483 = vadd.f32 %v1438, %v1482
    %1484 = vdwg.mxu0
    %v1485 = vand.u32 %v72, 4294901760
    %v1486 = vsub.f32 %v72, %v1485
    %v1487 = vand.u32 %v1486, 4294901760
    %1488 = vmatpush.msra.mxu0 %v1487
    %v1489 = vand.u32 %v71, 4294901760
    %v1490 = vsub.f32 %v71, %v1489
    %v1491 = vand.u32 %v1490, 4294901760
    %1492 = vmatpush.msra.mxu0 %v1491
    %v1493 = vand.u32 %v70, 4294901760
    %v1494 = vsub.f32 %v70, %v1493
    %v1495 = vand.u32 %v1494, 4294901760
    %1496 = vmatpush.msra.mxu0 %v1495
    %v1497 = vand.u32 %v69, 4294901760
    %v1498 = vsub.f32 %v69, %v1497
    %v1499 = vand.u32 %v1498, 4294901760
    %1500 = vmatpush.msra.mxu0 %v1499
    %v1501 = vand.u32 %v68, 4294901760
    %v1502 = vsub.f32 %v68, %v1501
    %v1503 = vand.u32 %v1502, 4294901760
    %1504 = vmatpush.msra.mxu0 %v1503
    %v1505 = vand.u32 %v67, 4294901760
    %v1506 = vsub.f32 %v67, %v1505
    %v1507 = vand.u32 %v1506, 4294901760
    %1508 = vmatpush.msra.mxu0 %v1507
    %v1509 = vand.u32 %v66, 4294901760
    %v1510 = vsub.f32 %v66, %v1509
    %v1511 = vand.u32 %v1510, 4294901760
    %1512 = vmatpush.msra.mxu0 %v1511
    %v1513 = vand.u32 %v65, 4294901760
    %v1514 = vsub.f32 %v65, %v1513
    %v1515 = vand.u32 %v1514, 4294901760
    %1516 = vmatpush.msra.mxu0 %v1515
    %v1517 = vand.u32 %v64, 4294901760
    %v1518 = vsub.f32 %v64, %v1517
    %v1519 = vand.u32 %v1518, 4294901760
    %1520 = vmatpush.msra.mxu0 %v1519
    %v1521 = vand.u32 %v63, 4294901760
    %v1522 = vsub.f32 %v63, %v1521
    %v1523 = vand.u32 %v1522, 4294901760
    %1524 = vmatpush.msra.mxu0 %v1523
    %v1525 = vand.u32 %v62, 4294901760
    %v1526 = vsub.f32 %v62, %v1525
    %v1527 = vand.u32 %v1526, 4294901760
    %1528 = vmatpush.msra.mxu0 %v1527
    %v1529 = vand.u32 %v61, 4294901760
    %v1530 = vsub.f32 %v61, %v1529
    %v1531 = vand.u32 %v1530, 4294901760
    %1532 = vmatpush.msra.mxu0 %v1531
    %v1533 = vand.u32 %v60, 4294901760
    %v1534 = vsub.f32 %v60, %v1533
    %v1535 = vand.u32 %v1534, 4294901760
    %1536 = vmatpush.msra.mxu0 %v1535
    %v1537 = vand.u32 %v59, 4294901760
    %v1538 = vsub.f32 %v59, %v1537
    %v1539 = vand.u32 %v1538, 4294901760
    %1540 = vmatpush.msra.mxu0 %v1539
    %v1541 = vand.u32 %v58, 4294901760
    %v1542 = vsub.f32 %v58, %v1541
    %v1543 = vand.u32 %v1542, 4294901760
    %1544 = vmatpush.msra.mxu0 %v1543
    %v1545 = vand.u32 %v57, 4294901760
    %v1546 = vsub.f32 %v57, %v1545
    %v1547 = vand.u32 %v1546, 4294901760
    %1548 = vmatpush.msra.mxu0 %v1547
    %v1549 = vand.u32 %v38, 4294901760
    %1550 = vmatmul.f32.gmra.mxu0 %v1549
    %v1551 = vpop.f32.mrf.mxu0
    %v1552 = vadd.f32 %v1477, %v1551
    %v1553 = vand.u32 %v40, 4294901760
    %1554 = vmatmul.f32.gmra.mxu0 %v1553
    %v1555 = vpop.f32.mrf.mxu0
    %v1556 = vadd.f32 %v1483, %v1555
    %1557 = vdwg.mxu0
    %v1558 = vand.u32 %v72, 4294901760
    %1559 = vmatpush.msra.mxu0 %v1558
    %v1560 = vand.u32 %v71, 4294901760
    %1561 = vmatpush.msra.mxu0 %v1560
    %v1562 = vand.u32 %v70, 4294901760
    %1563 = vmatpush.msra.mxu0 %v1562
    %v1564 = vand.u32 %v69, 4294901760
    %1565 = vmatpush.msra.mxu0 %v1564
    %v1566 = vand.u32 %v68, 4294901760
    %1567 = vmatpush.msra.mxu0 %v1566
    %v1568 = vand.u32 %v67, 4294901760
    %1569 = vmatpush.msra.mxu0 %v1568
    %v1570 = vand.u32 %v66, 4294901760
    %1571 = vmatpush.msra.mxu0 %v1570
    %v1572 = vand.u32 %v65, 4294901760
    %1573 = vmatpush.msra.mxu0 %v1572
    %v1574 = vand.u32 %v64, 4294901760
    %1575 = vmatpush.msra.mxu0 %v1574
    %v1576 = vand.u32 %v63, 4294901760
    %1577 = vmatpush.msra.mxu0 %v1576
    %v1578 = vand.u32 %v62, 4294901760
    %1579 = vmatpush.msra.mxu0 %v1578
    %v1580 = vand.u32 %v61, 4294901760
    %1581 = vmatpush.msra.mxu0 %v1580
    %v1582 = vand.u32 %v60, 4294901760
    %1583 = vmatpush.msra.mxu0 %v1582
    %v1584 = vand.u32 %v59, 4294901760
    %1585 = vmatpush.msra.mxu0 %v1584
    %v1586 = vand.u32 %v58, 4294901760
    %1587 = vmatpush.msra.mxu0 %v1586
    %v1588 = vand.u32 %v57, 4294901760
    %1589 = vmatpush.msra.mxu0 %v1588
    %v1590 = vand.u32 %v38, 4294901760
    %1591 = vmatmul.f32.gmra.mxu0 %v1590
    %v1592 = vpop.f32.mrf.mxu0
    %v1593 = vadd.f32 %v1552, %v1592
    %v1594 = vand.u32 %v40, 4294901760
    %1595 = vmatmul.f32.gmra.mxu0 %v1594
    %v1596 = vpop.f32.mrf.mxu0
    %v1597 = vadd.f32 %v1556, %v1596
    %1598 = vdwg.mxu0
    %s1599 = scalar_lea.vmem %s0, 32
    %v1600 = vld [vmem:[%s1599] sm:$0xff]
    %v1601 = vld [vmem:[%s1599 + $0x8] sm:$0xff]
    %v1602 = vld [vmem:[%s1599 + $0x30] sm:$0xff]
    %v1603 = vld [vmem:[%s1599 + $0x38] sm:$0xff]
    %s1604 = scalar_lea.vmem [#allocation2], 512
    %v1605 = vld [vmem:[%s1604] sm:$0xff]
    %v1606 = vld [vmem:[%s1604 + $0x8] sm:$0xff]
    %v1607 = vld [vmem:[%s1604 + $0x10] sm:$0xff]
    %v1608 = vld [vmem:[%s1604 + $0x18] sm:$0xff]
    %v1609 = vld [vmem:[%s1604 + $0x20] sm:$0xff]
    %v1610 = vld [vmem:[%s1604 + $0x28] sm:$0xff]
    %v1611 = vld [vmem:[%s1604 + $0x30] sm:$0xff]
    %v1612 = vld [vmem:[%s1604 + $0x38] sm:$0xff]
    %v1613 = vld [vmem:[%s1604 + $0x40] sm:$0xff]
    %v1614 = vld [vmem:[%s1604 + $0x48] sm:$0xff]
    %v1615 = vld [vmem:[%s1604 + $0x50] sm:$0xff]
    %v1616 = vld [vmem:[%s1604 + $0x58] sm:$0xff]
    %v1617 = vld [vmem:[%s1604 + $0x60] sm:$0xff]
    %v1618 = vld [vmem:[%s1604 + $0x68] sm:$0xff]
    %v1619 = vld [vmem:[%s1604 + $0x70] sm:$0xff]
    %v1620 = vld [vmem:[%s1604 + $0x78] sm:$0xff]
    %v1621 = vld [vmem:[%s1604 + $0x80] sm:$0xff]
    %v1622 = vld [vmem:[%s1604 + $0x88] sm:$0xff]
    %v1623 = vld [vmem:[%s1604 + $0x90] sm:$0xff]
    %v1624 = vld [vmem:[%s1604 + $0x98] sm:$0xff]
    %v1625 = vld [vmem:[%s1604 + $0xa0] sm:$0xff]
    %v1626 = vld [vmem:[%s1604 + $0xa8] sm:$0xff]
    %v1627 = vld [vmem:[%s1604 + $0xb0] sm:$0xff]
    %v1628 = vld [vmem:[%s1604 + $0xb8] sm:$0xff]
    %v1629 = vld [vmem:[%s1604 + $0xc0] sm:$0xff]
    %v1630 = vld [vmem:[%s1604 + $0xc8] sm:$0xff]
    %v1631 = vld [vmem:[%s1604 + $0xd0] sm:$0xff]
    %v1632 = vld [vmem:[%s1604 + $0xd8] sm:$0xff]
    %v1633 = vld [vmem:[%s1604 + $0xe0] sm:$0xff]
    %v1634 = vld [vmem:[%s1604 + $0xe8] sm:$0xff]
    %v1635 = vld [vmem:[%s1604 + $0xf0] sm:$0xff]
    %v1636 = vld [vmem:[%s1604 + $0xf8] sm:$0xff]
    %v1637 = vand.u32 %v1620, 4294901760
    %1638 = vmatpush.msra.mxu0 %v1637
    %v1639 = vand.u32 %v1619, 4294901760
    %1640 = vmatpush.msra.mxu0 %v1639
    %v1641 = vand.u32 %v1618, 4294901760
    %1642 = vmatpush.msra.mxu0 %v1641
    %v1643 = vand.u32 %v1617, 4294901760
    %1644 = vmatpush.msra.mxu0 %v1643
    %v1645 = vand.u32 %v1616, 4294901760
    %1646 = vmatpush.msra.mxu0 %v1645
    %v1647 = vand.u32 %v1615, 4294901760
    %1648 = vmatpush.msra.mxu0 %v1647
    %v1649 = vand.u32 %v1614, 4294901760
    %1650 = vmatpush.msra.mxu0 %v1649
    %v1651 = vand.u32 %v1613, 4294901760
    %1652 = vmatpush.msra.mxu0 %v1651
    %v1653 = vand.u32 %v1612, 4294901760
    %1654 = vmatpush.msra.mxu0 %v1653
    %v1655 = vand.u32 %v1611, 4294901760
    %1656 = vmatpush.msra.mxu0 %v1655
    %v1657 = vand.u32 %v1610, 4294901760
    %1658 = vmatpush.msra.mxu0 %v1657
    %v1659 = vand.u32 %v1609, 4294901760
    %1660 = vmatpush.msra.mxu0 %v1659
    %v1661 = vand.u32 %v1608, 4294901760
    %1662 = vmatpush.msra.mxu0 %v1661
    %v1663 = vand.u32 %v1607, 4294901760
    %1664 = vmatpush.msra.mxu0 %v1663
    %v1665 = vand.u32 %v1606, 4294901760
    %1666 = vmatpush.msra.mxu0 %v1665
    %v1667 = vand.u32 %v1605, 4294901760
    %1668 = vmatpush.msra.mxu0 %v1667
    %v1669 = vand.u32 %v1600, 4294901760
    %v1670 = vsub.f32 %v1600, %v1669
    %v1671 = vand.u32 %v1670, 4294901760
    %v1672 = vsub.f32 %v1670, %v1671
    %v1673 = vand.u32 %v1672, 4294901760
    %1674 = vmatmul.f32.gmra.mxu0 %v1673
    %v1675 = vpop.f32.mrf.mxu0
    %v1676 = vadd.f32 0.0, %v1675
    %v1677 = vand.u32 %v1602, 4294901760
    %v1678 = vsub.f32 %v1602, %v1677
    %v1679 = vand.u32 %v1678, 4294901760
    %v1680 = vsub.f32 %v1678, %v1679
    %v1681 = vand.u32 %v1680, 4294901760
    %1682 = vmatmul.f32.gmra.mxu0 %v1681
    %v1683 = vpop.f32.mrf.mxu0
    %v1684 = vadd.f32 0.0, %v1683
    %1685 = vdwg.mxu0
    %v1686 = vand.u32 %v1620, 4294901760
    %v1687 = vsub.f32 %v1620, %v1686
    %v1688 = vand.u32 %v1687, 4294901760
    %v1689 = vsub.f32 %v1687, %v1688
    %v1690 = vand.u32 %v1689, 4294901760
    %1691 = vmatpush.msra.mxu0 %v1690
    %v1692 = vand.u32 %v1619, 4294901760
    %v1693 = vsub.f32 %v1619, %v1692
    %v1694 = vand.u32 %v1693, 4294901760
    %v1695 = vsub.f32 %v1693, %v1694
    %v1696 = vand.u32 %v1695, 4294901760
    %1697 = vmatpush.msra.mxu0 %v1696
    %v1698 = vand.u32 %v1618, 4294901760
    %v1699 = vsub.f32 %v1618, %v1698
    %v1700 = vand.u32 %v1699, 4294901760
    %v1701 = vsub.f32 %v1699, %v1700
    %v1702 = vand.u32 %v1701, 4294901760
    %1703 = vmatpush.msra.mxu0 %v1702
    %v1704 = vand.u32 %v1617, 4294901760
    %v1705 = vsub.f32 %v1617, %v1704
    %v1706 = vand.u32 %v1705, 4294901760
    %v1707 = vsub.f32 %v1705, %v1706
    %v1708 = vand.u32 %v1707, 4294901760
    %1709 = vmatpush.msra.mxu0 %v1708
    %v1710 = vand.u32 %v1616, 4294901760
    %v1711 = vsub.f32 %v1616, %v1710
    %v1712 = vand.u32 %v1711, 4294901760
    %v1713 = vsub.f32 %v1711, %v1712
    %v1714 = vand.u32 %v1713, 4294901760
    %1715 = vmatpush.msra.mxu0 %v1714
    %v1716 = vand.u32 %v1615, 4294901760
    %v1717 = vsub.f32 %v1615, %v1716
    %v1718 = vand.u32 %v1717, 4294901760
    %v1719 = vsub.f32 %v1717, %v1718
    %v1720 = vand.u32 %v1719, 4294901760
    %1721 = vmatpush.msra.mxu0 %v1720
    %v1722 = vand.u32 %v1614, 4294901760
    %v1723 = vsub.f32 %v1614, %v1722
    %v1724 = vand.u32 %v1723, 4294901760
    %v1725 = vsub.f32 %v1723, %v1724
    %v1726 = vand.u32 %v1725, 4294901760
    %1727 = vmatpush.msra.mxu0 %v1726
    %v1728 = vand.u32 %v1613, 4294901760
    %v1729 = vsub.f32 %v1613, %v1728
    %v1730 = vand.u32 %v1729, 4294901760
    %v1731 = vsub.f32 %v1729, %v1730
    %v1732 = vand.u32 %v1731, 4294901760
    %1733 = vmatpush.msra.mxu0 %v1732
    %v1734 = vand.u32 %v1612, 4294901760
    %v1735 = vsub.f32 %v1612, %v1734
    %v1736 = vand.u32 %v1735, 4294901760
    %v1737 = vsub.f32 %v1735, %v1736
    %v1738 = vand.u32 %v1737, 4294901760
    %1739 = vmatpush.msra.mxu0 %v1738
    %v1740 = vand.u32 %v1611, 4294901760
    %v1741 = vsub.f32 %v1611, %v1740
    %v1742 = vand.u32 %v1741, 4294901760
    %v1743 = vsub.f32 %v1741, %v1742
    %v1744 = vand.u32 %v1743, 4294901760
    %1745 = vmatpush.msra.mxu0 %v1744
    %v1746 = vand.u32 %v1610, 4294901760
    %v1747 = vsub.f32 %v1610, %v1746
    %v1748 = vand.u32 %v1747, 4294901760
    %v1749 = vsub.f32 %v1747, %v1748
    %v1750 = vand.u32 %v1749, 4294901760
    %1751 = vmatpush.msra.mxu0 %v1750
    %v1752 = vand.u32 %v1609, 4294901760
    %v1753 = vsub.f32 %v1609, %v1752
    %v1754 = vand.u32 %v1753, 4294901760
    %v1755 = vsub.f32 %v1753, %v1754
    %v1756 = vand.u32 %v1755, 4294901760
    %1757 = vmatpush.msra.mxu0 %v1756
    %v1758 = vand.u32 %v1608, 4294901760
    %v1759 = vsub.f32 %v1608, %v1758
    %v1760 = vand.u32 %v1759, 4294901760
    %v1761 = vsub.f32 %v1759, %v1760
    %v1762 = vand.u32 %v1761, 4294901760
    %1763 = vmatpush.msra.mxu0 %v1762
    %v1764 = vand.u32 %v1607, 4294901760
    %v1765 = vsub.f32 %v1607, %v1764
    %v1766 = vand.u32 %v1765, 4294901760
    %v1767 = vsub.f32 %v1765, %v1766
    %v1768 = vand.u32 %v1767, 4294901760
    %1769 = vmatpush.msra.mxu0 %v1768
    %v1770 = vand.u32 %v1606, 4294901760
    %v1771 = vsub.f32 %v1606, %v1770
    %v1772 = vand.u32 %v1771, 4294901760
    %v1773 = vsub.f32 %v1771, %v1772
    %v1774 = vand.u32 %v1773, 4294901760
    %1775 = vmatpush.msra.mxu0 %v1774
    %v1776 = vand.u32 %v1605, 4294901760
    %v1777 = vsub.f32 %v1605, %v1776
    %v1778 = vand.u32 %v1777, 4294901760
    %v1779 = vsub.f32 %v1777, %v1778
    %v1780 = vand.u32 %v1779, 4294901760
    %1781 = vmatpush.msra.mxu0 %v1780
    %v1782 = vand.u32 %v1600, 4294901760
    %1783 = vmatmul.f32.gmra.mxu0 %v1782
    %v1784 = vpop.f32.mrf.mxu0
    %v1785 = vadd.f32 %v1676, %v1784
    %v1786 = vand.u32 %v1602, 4294901760
    %1787 = vmatmul.f32.gmra.mxu0 %v1786
    %v1788 = vpop.f32.mrf.mxu0
    %v1789 = vadd.f32 %v1684, %v1788
    %1790 = vdwg.mxu0
    %v1791 = vand.u32 %v1620, 4294901760
    %v1792 = vsub.f32 %v1620, %v1791
    %1793 = vmatpush.msra.mxu0 %v1792
    %v1794 = vand.u32 %v1619, 4294901760
    %v1795 = vsub.f32 %v1619, %v1794
    %1796 = vmatpush.msra.mxu0 %v1795
    %v1797 = vand.u32 %v1618, 4294901760
    %v1798 = vsub.f32 %v1618, %v1797
    %1799 = vmatpush.msra.mxu0 %v1798
    %v1800 = vand.u32 %v1617, 4294901760
    %v1801 = vsub.f32 %v1617, %v1800
    %1802 = vmatpush.msra.mxu0 %v1801
    %v1803 = vand.u32 %v1616, 4294901760
    %v1804 = vsub.f32 %v1616, %v1803
    %1805 = vmatpush.msra.mxu0 %v1804
    %v1806 = vand.u32 %v1615, 4294901760
    %v1807 = vsub.f32 %v1615, %v1806
    %1808 = vmatpush.msra.mxu0 %v1807
    %v1809 = vand.u32 %v1614, 4294901760
    %v1810 = vsub.f32 %v1614, %v1809
    %1811 = vmatpush.msra.mxu0 %v1810
    %v1812 = vand.u32 %v1613, 4294901760
    %v1813 = vsub.f32 %v1613, %v1812
    %1814 = vmatpush.msra.mxu0 %v1813
    %v1815 = vand.u32 %v1612, 4294901760
    %v1816 = vsub.f32 %v1612, %v1815
    %1817 = vmatpush.msra.mxu0 %v1816
    %v1818 = vand.u32 %v1611, 4294901760
    %v1819 = vsub.f32 %v1611, %v1818
    %1820 = vmatpush.msra.mxu0 %v1819
    %v1821 = vand.u32 %v1610, 4294901760
    %v1822 = vsub.f32 %v1610, %v1821
    %1823 = vmatpush.msra.mxu0 %v1822
    %v1824 = vand.u32 %v1609, 4294901760
    %v1825 = vsub.f32 %v1609, %v1824
    %1826 = vmatpush.msra.mxu0 %v1825
    %v1827 = vand.u32 %v1608, 4294901760
    %v1828 = vsub.f32 %v1608, %v1827
    %1829 = vmatpush.msra.mxu0 %v1828
    %v1830 = vand.u32 %v1607, 4294901760
    %v1831 = vsub.f32 %v1607, %v1830
    %1832 = vmatpush.msra.mxu0 %v1831
    %v1833 = vand.u32 %v1606, 4294901760
    %v1834 = vsub.f32 %v1606, %v1833
    %1835 = vmatpush.msra.mxu0 %v1834
    %v1836 = vand.u32 %v1605, 4294901760
    %v1837 = vsub.f32 %v1605, %v1836
    %1838 = vmatpush.msra.mxu0 %v1837
    %v1839 = vand.u32 %v1600, 4294901760
    %v1840 = vsub.f32 %v1600, %v1839
    %1841 = vmatmul.f32.gmra.mxu0 %v1840
    %v1842 = vpop.f32.mrf.mxu0
    %v1843 = vadd.f32 %v1785, %v1842
    %v1844 = vand.u32 %v1602, 4294901760
    %v1845 = vsub.f32 %v1602, %v1844
    %1846 = vmatmul.f32.gmra.mxu0 %v1845
    %v1847 = vpop.f32.mrf.mxu0
    %v1848 = vadd.f32 %v1789, %v1847
    %1849 = vdwg.mxu0
    %v1850 = vand.u32 %v1620, 4294901760
    %1851 = vmatpush.msra.mxu0 %v1850
    %v1852 = vand.u32 %v1619, 4294901760
    %1853 = vmatpush.msra.mxu0 %v1852
    %v1854 = vand.u32 %v1618, 4294901760
    %1855 = vmatpush.msra.mxu0 %v1854
    %v1856 = vand.u32 %v1617, 4294901760
    %1857 = vmatpush.msra.mxu0 %v1856
    %v1858 = vand.u32 %v1616, 4294901760
    %1859 = vmatpush.msra.mxu0 %v1858
    %v1860 = vand.u32 %v1615, 4294901760
    %1861 = vmatpush.msra.mxu0 %v1860
    %v1862 = vand.u32 %v1614, 4294901760
    %1863 = vmatpush.msra.mxu0 %v1862
    %v1864 = vand.u32 %v1613, 4294901760
    %1865 = vmatpush.msra.mxu0 %v1864
    %v1866 = vand.u32 %v1612, 4294901760
    %1867 = vmatpush.msra.mxu0 %v1866
    %v1868 = vand.u32 %v1611, 4294901760
    %1869 = vmatpush.msra.mxu0 %v1868
    %v1870 = vand.u32 %v1610, 4294901760
    %1871 = vmatpush.msra.mxu0 %v1870
    %v1872 = vand.u32 %v1609, 4294901760
    %1873 = vmatpush.msra.mxu0 %v1872
    %v1874 = vand.u32 %v1608, 4294901760
    %1875 = vmatpush.msra.mxu0 %v1874
    %v1876 = vand.u32 %v1607, 4294901760
    %1877 = vmatpush.msra.mxu0 %v1876
    %v1878 = vand.u32 %v1606, 4294901760
    %1879 = vmatpush.msra.mxu0 %v1878
    %v1880 = vand.u32 %v1605, 4294901760
    %1881 = vmatpush.msra.mxu0 %v1880
    %v1882 = vand.u32 %v1600, 4294901760
    %v1883 = vsub.f32 %v1600, %v1882
    %v1884 = vand.u32 %v1883, 4294901760
    %1885 = vmatmul.f32.gmra.mxu0 %v1884
    %v1886 = vpop.f32.mrf.mxu0
    %v1887 = vadd.f32 %v1843, %v1886
    %v1888 = vand.u32 %v1602, 4294901760
    %v1889 = vsub.f32 %v1602, %v1888
    %v1890 = vand.u32 %v1889, 4294901760
    %1891 = vmatmul.f32.gmra.mxu0 %v1890
    %v1892 = vpop.f32.mrf.mxu0
    %v1893 = vadd.f32 %v1848, %v1892
    %1894 = vdwg.mxu0
    %v1895 = vand.u32 %v1620, 4294901760
    %v1896 = vsub.f32 %v1620, %v1895
    %v1897 = vand.u32 %v1896, 4294901760
    %1898 = vmatpush.msra.mxu0 %v1897
    %v1899 = vand.u32 %v1619, 4294901760
    %v1900 = vsub.f32 %v1619, %v1899
    %v1901 = vand.u32 %v1900, 4294901760
    %1902 = vmatpush.msra.mxu0 %v1901
    %v1903 = vand.u32 %v1618, 4294901760
    %v1904 = vsub.f32 %v1618, %v1903
    %v1905 = vand.u32 %v1904, 4294901760
    %1906 = vmatpush.msra.mxu0 %v1905
    %v1907 = vand.u32 %v1617, 4294901760
    %v1908 = vsub.f32 %v1617, %v1907
    %v1909 = vand.u32 %v1908, 4294901760
    %1910 = vmatpush.msra.mxu0 %v1909
    %v1911 = vand.u32 %v1616, 4294901760
    %v1912 = vsub.f32 %v1616, %v1911
    %v1913 = vand.u32 %v1912, 4294901760
    %1914 = vmatpush.msra.mxu0 %v1913
    %v1915 = vand.u32 %v1615, 4294901760
    %v1916 = vsub.f32 %v1615, %v1915
    %v1917 = vand.u32 %v1916, 4294901760
    %1918 = vmatpush.msra.mxu0 %v1917
    %v1919 = vand.u32 %v1614, 4294901760
    %v1920 = vsub.f32 %v1614, %v1919
    %v1921 = vand.u32 %v1920, 4294901760
    %1922 = vmatpush.msra.mxu0 %v1921
    %v1923 = vand.u32 %v1613, 4294901760
    %v1924 = vsub.f32 %v1613, %v1923
    %v1925 = vand.u32 %v1924, 4294901760
    %1926 = vmatpush.msra.mxu0 %v1925
    %v1927 = vand.u32 %v1612, 4294901760
    %v1928 = vsub.f32 %v1612, %v1927
    %v1929 = vand.u32 %v1928, 4294901760
    %1930 = vmatpush.msra.mxu0 %v1929
    %v1931 = vand.u32 %v1611, 4294901760
    %v1932 = vsub.f32 %v1611, %v1931
    %v1933 = vand.u32 %v1932, 4294901760
    %1934 = vmatpush.msra.mxu0 %v1933
    %v1935 = vand.u32 %v1610, 4294901760
    %v1936 = vsub.f32 %v1610, %v1935
    %v1937 = vand.u32 %v1936, 4294901760
    %1938 = vmatpush.msra.mxu0 %v1937
    %v1939 = vand.u32 %v1609, 4294901760
    %v1940 = vsub.f32 %v1609, %v1939
    %v1941 = vand.u32 %v1940, 4294901760
    %1942 = vmatpush.msra.mxu0 %v1941
    %v1943 = vand.u32 %v1608, 4294901760
    %v1944 = vsub.f32 %v1608, %v1943
    %v1945 = vand.u32 %v1944, 4294901760
    %1946 = vmatpush.msra.mxu0 %v1945
    %v1947 = vand.u32 %v1607, 4294901760
    %v1948 = vsub.f32 %v1607, %v1947
    %v1949 = vand.u32 %v1948, 4294901760
    %1950 = vmatpush.msra.mxu0 %v1949
    %v1951 = vand.u32 %v1606, 4294901760
    %v1952 = vsub.f32 %v1606, %v1951
    %v1953 = vand.u32 %v1952, 4294901760
    %1954 = vmatpush.msra.mxu0 %v1953
    %v1955 = vand.u32 %v1605, 4294901760
    %v1956 = vsub.f32 %v1605, %v1955
    %v1957 = vand.u32 %v1956, 4294901760
    %1958 = vmatpush.msra.mxu0 %v1957
    %v1959 = vand.u32 %v1600, 4294901760
    %1960 = vmatmul.f32.gmra.mxu0 %v1959
    %v1961 = vpop.f32.mrf.mxu0
    %v1962 = vadd.f32 %v1887, %v1961
    %v1963 = vand.u32 %v1602, 4294901760
    %1964 = vmatmul.f32.gmra.mxu0 %v1963
    %v1965 = vpop.f32.mrf.mxu0
    %v1966 = vadd.f32 %v1893, %v1965
    %1967 = vdwg.mxu0
    %v1968 = vand.u32 %v1620, 4294901760
    %1969 = vmatpush.msra.mxu0 %v1968
    %v1970 = vand.u32 %v1619, 4294901760
    %1971 = vmatpush.msra.mxu0 %v1970
    %v1972 = vand.u32 %v1618, 4294901760
    %1973 = vmatpush.msra.mxu0 %v1972
    %v1974 = vand.u32 %v1617, 4294901760
    %1975 = vmatpush.msra.mxu0 %v1974
    %v1976 = vand.u32 %v1616, 4294901760
    %1977 = vmatpush.msra.mxu0 %v1976
    %v1978 = vand.u32 %v1615, 4294901760
    %1979 = vmatpush.msra.mxu0 %v1978
    %v1980 = vand.u32 %v1614, 4294901760
    %1981 = vmatpush.msra.mxu0 %v1980
    %v1982 = vand.u32 %v1613, 4294901760
    %1983 = vmatpush.msra.mxu0 %v1982
    %v1984 = vand.u32 %v1612, 4294901760
    %1985 = vmatpush.msra.mxu0 %v1984
    %v1986 = vand.u32 %v1611, 4294901760
    %1987 = vmatpush.msra.mxu0 %v1986
    %v1988 = vand.u32 %v1610, 4294901760
    %1989 = vmatpush.msra.mxu0 %v1988
    %v1990 = vand.u32 %v1609, 4294901760
    %1991 = vmatpush.msra.mxu0 %v1990
    %v1992 = vand.u32 %v1608, 4294901760
    %1993 = vmatpush.msra.mxu0 %v1992
    %v1994 = vand.u32 %v1607, 4294901760
    %1995 = vmatpush.msra.mxu0 %v1994
    %v1996 = vand.u32 %v1606, 4294901760
    %1997 = vmatpush.msra.mxu0 %v1996
    %v1998 = vand.u32 %v1605, 4294901760
    %1999 = vmatpush.msra.mxu0 %v1998
    %v2000 = vand.u32 %v1600, 4294901760
    %2001 = vmatmul.f32.gmra.mxu0 %v2000
    %v2002 = vpop.f32.mrf.mxu0
    %v2003 = vadd.f32 %v1962, %v2002
    %v2004 = vand.u32 %v1602, 4294901760
    %2005 = vmatmul.f32.gmra.mxu0 %v2004
    %v2006 = vpop.f32.mrf.mxu0
    %v2007 = vadd.f32 %v1966, %v2006
    %2008 = vdwg.mxu0
    %v2009 = vand.u32 %v1636, 4294901760
    %2010 = vmatpush.msra.mxu0 %v2009
    %v2011 = vand.u32 %v1635, 4294901760
    %2012 = vmatpush.msra.mxu0 %v2011
    %v2013 = vand.u32 %v1634, 4294901760
    %2014 = vmatpush.msra.mxu0 %v2013
    %v2015 = vand.u32 %v1633, 4294901760
    %2016 = vmatpush.msra.mxu0 %v2015
    %v2017 = vand.u32 %v1632, 4294901760
    %2018 = vmatpush.msra.mxu0 %v2017
    %v2019 = vand.u32 %v1631, 4294901760
    %2020 = vmatpush.msra.mxu0 %v2019
    %v2021 = vand.u32 %v1630, 4294901760
    %2022 = vmatpush.msra.mxu0 %v2021
    %v2023 = vand.u32 %v1629, 4294901760
    %2024 = vmatpush.msra.mxu0 %v2023
    %v2025 = vand.u32 %v1628, 4294901760
    %2026 = vmatpush.msra.mxu0 %v2025
    %v2027 = vand.u32 %v1627, 4294901760
    %2028 = vmatpush.msra.mxu0 %v2027
    %v2029 = vand.u32 %v1626, 4294901760
    %2030 = vmatpush.msra.mxu0 %v2029
    %v2031 = vand.u32 %v1625, 4294901760
    %2032 = vmatpush.msra.mxu0 %v2031
    %v2033 = vand.u32 %v1624, 4294901760
    %2034 = vmatpush.msra.mxu0 %v2033
    %v2035 = vand.u32 %v1623, 4294901760
    %2036 = vmatpush.msra.mxu0 %v2035
    %v2037 = vand.u32 %v1622, 4294901760
    %2038 = vmatpush.msra.mxu0 %v2037
    %v2039 = vand.u32 %v1621, 4294901760
    %2040 = vmatpush.msra.mxu0 %v2039
    %v2041 = vand.u32 %v1601, 4294901760
    %v2042 = vsub.f32 %v1601, %v2041
    %v2043 = vand.u32 %v2042, 4294901760
    %v2044 = vsub.f32 %v2042, %v2043
    %v2045 = vand.u32 %v2044, 4294901760
    %2046 = vmatmul.f32.gmra.mxu0 %v2045
    %v2047 = vpop.f32.mrf.mxu0
    %v2048 = vadd.f32 %v2003, %v2047
    %v2049 = vand.u32 %v1603, 4294901760
    %v2050 = vsub.f32 %v1603, %v2049
    %v2051 = vand.u32 %v2050, 4294901760
    %v2052 = vsub.f32 %v2050, %v2051
    %v2053 = vand.u32 %v2052, 4294901760
    %2054 = vmatmul.f32.gmra.mxu0 %v2053
    %v2055 = vpop.f32.mrf.mxu0
    %v2056 = vadd.f32 %v2007, %v2055
    %2057 = vdwg.mxu0
    %v2058 = vand.u32 %v1636, 4294901760
    %v2059 = vsub.f32 %v1636, %v2058
    %v2060 = vand.u32 %v2059, 4294901760
    %v2061 = vsub.f32 %v2059, %v2060
    %v2062 = vand.u32 %v2061, 4294901760
    %2063 = vmatpush.msra.mxu0 %v2062
    %v2064 = vand.u32 %v1635, 4294901760
    %v2065 = vsub.f32 %v1635, %v2064
    %v2066 = vand.u32 %v2065, 4294901760
    %v2067 = vsub.f32 %v2065, %v2066
    %v2068 = vand.u32 %v2067, 4294901760
    %2069 = vmatpush.msra.mxu0 %v2068
    %v2070 = vand.u32 %v1634, 4294901760
    %v2071 = vsub.f32 %v1634, %v2070
    %v2072 = vand.u32 %v2071, 4294901760
    %v2073 = vsub.f32 %v2071, %v2072
    %v2074 = vand.u32 %v2073, 4294901760
    %2075 = vmatpush.msra.mxu0 %v2074
    %v2076 = vand.u32 %v1633, 4294901760
    %v2077 = vsub.f32 %v1633, %v2076
    %v2078 = vand.u32 %v2077, 4294901760
    %v2079 = vsub.f32 %v2077, %v2078
    %v2080 = vand.u32 %v2079, 4294901760
    %2081 = vmatpush.msra.mxu0 %v2080
    %v2082 = vand.u32 %v1632, 4294901760
    %v2083 = vsub.f32 %v1632, %v2082
    %v2084 = vand.u32 %v2083, 4294901760
    %v2085 = vsub.f32 %v2083, %v2084
    %v2086 = vand.u32 %v2085, 4294901760
    %2087 = vmatpush.msra.mxu0 %v2086
    %v2088 = vand.u32 %v1631, 4294901760
    %v2089 = vsub.f32 %v1631, %v2088
    %v2090 = vand.u32 %v2089, 4294901760
    %v2091 = vsub.f32 %v2089, %v2090
    %v2092 = vand.u32 %v2091, 4294901760
    %2093 = vmatpush.msra.mxu0 %v2092
    %v2094 = vand.u32 %v1630, 4294901760
    %v2095 = vsub.f32 %v1630, %v2094
    %v2096 = vand.u32 %v2095, 4294901760
    %v2097 = vsub.f32 %v2095, %v2096
    %v2098 = vand.u32 %v2097, 4294901760
    %2099 = vmatpush.msra.mxu0 %v2098
    %v2100 = vand.u32 %v1629, 4294901760
    %v2101 = vsub.f32 %v1629, %v2100
    %v2102 = vand.u32 %v2101, 4294901760
    %v2103 = vsub.f32 %v2101, %v2102
    %v2104 = vand.u32 %v2103, 4294901760
    %2105 = vmatpush.msra.mxu0 %v2104
    %v2106 = vand.u32 %v1628, 4294901760
    %v2107 = vsub.f32 %v1628, %v2106
    %v2108 = vand.u32 %v2107, 4294901760
    %v2109 = vsub.f32 %v2107, %v2108
    %v2110 = vand.u32 %v2109, 4294901760
    %2111 = vmatpush.msra.mxu0 %v2110
    %v2112 = vand.u32 %v1627, 4294901760
    %v2113 = vsub.f32 %v1627, %v2112
    %v2114 = vand.u32 %v2113, 4294901760
    %v2115 = vsub.f32 %v2113, %v2114
    %v2116 = vand.u32 %v2115, 4294901760
    %2117 = vmatpush.msra.mxu0 %v2116
    %v2118 = vand.u32 %v1626, 4294901760
    %v2119 = vsub.f32 %v1626, %v2118
    %v2120 = vand.u32 %v2119, 4294901760
    %v2121 = vsub.f32 %v2119, %v2120
    %v2122 = vand.u32 %v2121, 4294901760
    %2123 = vmatpush.msra.mxu0 %v2122
    %v2124 = vand.u32 %v1625, 4294901760
    %v2125 = vsub.f32 %v1625, %v2124
    %v2126 = vand.u32 %v2125, 4294901760
    %v2127 = vsub.f32 %v2125, %v2126
    %v2128 = vand.u32 %v2127, 4294901760
    %2129 = vmatpush.msra.mxu0 %v2128
    %v2130 = vand.u32 %v1624, 4294901760
    %v2131 = vsub.f32 %v1624, %v2130
    %v2132 = vand.u32 %v2131, 4294901760
    %v2133 = vsub.f32 %v2131, %v2132
    %v2134 = vand.u32 %v2133, 4294901760
    %2135 = vmatpush.msra.mxu0 %v2134
    %v2136 = vand.u32 %v1623, 4294901760
    %v2137 = vsub.f32 %v1623, %v2136
    %v2138 = vand.u32 %v2137, 4294901760
    %v2139 = vsub.f32 %v2137, %v2138
    %v2140 = vand.u32 %v2139, 4294901760
    %2141 = vmatpush.msra.mxu0 %v2140
    %v2142 = vand.u32 %v1622, 4294901760
    %v2143 = vsub.f32 %v1622, %v2142
    %v2144 = vand.u32 %v2143, 4294901760
    %v2145 = vsub.f32 %v2143, %v2144
    %v2146 = vand.u32 %v2145, 4294901760
    %2147 = vmatpush.msra.mxu0 %v2146
    %v2148 = vand.u32 %v1621, 4294901760
    %v2149 = vsub.f32 %v1621, %v2148
    %v2150 = vand.u32 %v2149, 4294901760
    %v2151 = vsub.f32 %v2149, %v2150
    %v2152 = vand.u32 %v2151, 4294901760
    %2153 = vmatpush.msra.mxu0 %v2152
    %v2154 = vand.u32 %v1601, 4294901760
    %2155 = vmatmul.f32.gmra.mxu0 %v2154
    %v2156 = vpop.f32.mrf.mxu0
    %v2157 = vadd.f32 %v2048, %v2156
    %v2158 = vand.u32 %v1603, 4294901760
    %2159 = vmatmul.f32.gmra.mxu0 %v2158
    %v2160 = vpop.f32.mrf.mxu0
    %v2161 = vadd.f32 %v2056, %v2160
    %2162 = vdwg.mxu0
    %v2163 = vand.u32 %v1636, 4294901760
    %v2164 = vsub.f32 %v1636, %v2163
    %2165 = vmatpush.msra.mxu0 %v2164
    %v2166 = vand.u32 %v1635, 4294901760
    %v2167 = vsub.f32 %v1635, %v2166
    %2168 = vmatpush.msra.mxu0 %v2167
    %v2169 = vand.u32 %v1634, 4294901760
    %v2170 = vsub.f32 %v1634, %v2169
    %2171 = vmatpush.msra.mxu0 %v2170
    %v2172 = vand.u32 %v1633, 4294901760
    %v2173 = vsub.f32 %v1633, %v2172
    %2174 = vmatpush.msra.mxu0 %v2173
    %v2175 = vand.u32 %v1632, 4294901760
    %v2176 = vsub.f32 %v1632, %v2175
    %2177 = vmatpush.msra.mxu0 %v2176
    %v2178 = vand.u32 %v1631, 4294901760
    %v2179 = vsub.f32 %v1631, %v2178
    %2180 = vmatpush.msra.mxu0 %v2179
    %v2181 = vand.u32 %v1630, 4294901760
    %v2182 = vsub.f32 %v1630, %v2181
    %2183 = vmatpush.msra.mxu0 %v2182
    %v2184 = vand.u32 %v1629, 4294901760
    %v2185 = vsub.f32 %v1629, %v2184
    %2186 = vmatpush.msra.mxu0 %v2185
    %v2187 = vand.u32 %v1628, 4294901760
    %v2188 = vsub.f32 %v1628, %v2187
    %2189 = vmatpush.msra.mxu0 %v2188
    %v2190 = vand.u32 %v1627, 4294901760
    %v2191 = vsub.f32 %v1627, %v2190
    %2192 = vmatpush.msra.mxu0 %v2191
    %v2193 = vand.u32 %v1626, 4294901760
    %v2194 = vsub.f32 %v1626, %v2193
    %2195 = vmatpush.msra.mxu0 %v2194
    %v2196 = vand.u32 %v1625, 4294901760
    %v2197 = vsub.f32 %v1625, %v2196
    %2198 = vmatpush.msra.mxu0 %v2197
    %v2199 = vand.u32 %v1624, 4294901760
    %v2200 = vsub.f32 %v1624, %v2199
    %2201 = vmatpush.msra.mxu0 %v2200
    %v2202 = vand.u32 %v1623, 4294901760
    %v2203 = vsub.f32 %v1623, %v2202
    %2204 = vmatpush.msra.mxu0 %v2203
    %v2205 = vand.u32 %v1622, 4294901760
    %v2206 = vsub.f32 %v1622, %v2205
    %2207 = vmatpush.msra.mxu0 %v2206
    %v2208 = vand.u32 %v1621, 4294901760
    %v2209 = vsub.f32 %v1621, %v2208
    %2210 = vmatpush.msra.mxu0 %v2209
    %v2211 = vand.u32 %v1601, 4294901760
    %v2212 = vsub.f32 %v1601, %v2211
    %2213 = vmatmul.f32.gmra.mxu0 %v2212
    %v2214 = vpop.f32.mrf.mxu0
    %v2215 = vadd.f32 %v2157, %v2214
    %v2216 = vand.u32 %v1603, 4294901760
    %v2217 = vsub.f32 %v1603, %v2216
    %2218 = vmatmul.f32.gmra.mxu0 %v2217
    %v2219 = vpop.f32.mrf.mxu0
    %v2220 = vadd.f32 %v2161, %v2219
    %2221 = vdwg.mxu0
    %v2222 = vand.u32 %v1636, 4294901760
    %2223 = vmatpush.msra.mxu0 %v2222
    %v2224 = vand.u32 %v1635, 4294901760
    %2225 = vmatpush.msra.mxu0 %v2224
    %v2226 = vand.u32 %v1634, 4294901760
    %2227 = vmatpush.msra.mxu0 %v2226
    %v2228 = vand.u32 %v1633, 4294901760
    %2229 = vmatpush.msra.mxu0 %v2228
    %v2230 = vand.u32 %v1632, 4294901760
    %2231 = vmatpush.msra.mxu0 %v2230
    %v2232 = vand.u32 %v1631, 4294901760
    %2233 = vmatpush.msra.mxu0 %v2232
    %v2234 = vand.u32 %v1630, 4294901760
    %2235 = vmatpush.msra.mxu0 %v2234
    %v2236 = vand.u32 %v1629, 4294901760
    %2237 = vmatpush.msra.mxu0 %v2236
    %v2238 = vand.u32 %v1628, 4294901760
    %2239 = vmatpush.msra.mxu0 %v2238
    %v2240 = vand.u32 %v1627, 4294901760
    %2241 = vmatpush.msra.mxu0 %v2240
    %v2242 = vand.u32 %v1626, 4294901760
    %2243 = vmatpush.msra.mxu0 %v2242
    %v2244 = vand.u32 %v1625, 4294901760
    %2245 = vmatpush.msra.mxu0 %v2244
    %v2246 = vand.u32 %v1624, 4294901760
    %2247 = vmatpush.msra.mxu0 %v2246
    %v2248 = vand.u32 %v1623, 4294901760
    %2249 = vmatpush.msra.mxu0 %v2248
    %v2250 = vand.u32 %v1622, 4294901760
    %2251 = vmatpush.msra.mxu0 %v2250
    %v2252 = vand.u32 %v1621, 4294901760
    %2253 = vmatpush.msra.mxu0 %v2252
    %v2254 = vand.u32 %v1601, 4294901760
    %v2255 = vsub.f32 %v1601, %v2254
    %v2256 = vand.u32 %v2255, 4294901760
    %2257 = vmatmul.f32.gmra.mxu0 %v2256
    %v2258 = vpop.f32.mrf.mxu0
    %v2259 = vadd.f32 %v2215, %v2258
    %v2260 = vand.u32 %v1603, 4294901760
    %v2261 = vsub.f32 %v1603, %v2260
    %v2262 = vand.u32 %v2261, 4294901760
    %2263 = vmatmul.f32.gmra.mxu0 %v2262
    %v2264 = vpop.f32.mrf.mxu0
    %v2265 = vadd.f32 %v2220, %v2264
    %2266 = vdwg.mxu0
    %v2267 = vand.u32 %v1636, 4294901760
    %v2268 = vsub.f32 %v1636, %v2267
    %v2269 = vand.u32 %v2268, 4294901760
    %2270 = vmatpush.msra.mxu0 %v2269
    %v2271 = vand.u32 %v1635, 4294901760
    %v2272 = vsub.f32 %v1635, %v2271
    %v2273 = vand.u32 %v2272, 4294901760
    %2274 = vmatpush.msra.mxu0 %v2273
    %v2275 = vand.u32 %v1634, 4294901760
    %v2276 = vsub.f32 %v1634, %v2275
    %v2277 = vand.u32 %v2276, 4294901760
    %2278 = vmatpush.msra.mxu0 %v2277
    %v2279 = vand.u32 %v1633, 4294901760
    %v2280 = vsub.f32 %v1633, %v2279
    %v2281 = vand.u32 %v2280, 4294901760
    %2282 = vmatpush.msra.mxu0 %v2281
    %v2283 = vand.u32 %v1632, 4294901760
    %v2284 = vsub.f32 %v1632, %v2283
    %v2285 = vand.u32 %v2284, 4294901760
    %2286 = vmatpush.msra.mxu0 %v2285
    %v2287 = vand.u32 %v1631, 4294901760
    %v2288 = vsub.f32 %v1631, %v2287
    %v2289 = vand.u32 %v2288, 4294901760
    %2290 = vmatpush.msra.mxu0 %v2289
    %v2291 = vand.u32 %v1630, 4294901760
    %v2292 = vsub.f32 %v1630, %v2291
    %v2293 = vand.u32 %v2292, 4294901760
    %2294 = vmatpush.msra.mxu0 %v2293
    %v2295 = vand.u32 %v1629, 4294901760
    %v2296 = vsub.f32 %v1629, %v2295
    %v2297 = vand.u32 %v2296, 4294901760
    %2298 = vmatpush.msra.mxu0 %v2297
    %v2299 = vand.u32 %v1628, 4294901760
    %v2300 = vsub.f32 %v1628, %v2299
    %v2301 = vand.u32 %v2300, 4294901760
    %2302 = vmatpush.msra.mxu0 %v2301
    %v2303 = vand.u32 %v1627, 4294901760
    %v2304 = vsub.f32 %v1627, %v2303
    %v2305 = vand.u32 %v2304, 4294901760
    %2306 = vmatpush.msra.mxu0 %v2305
    %v2307 = vand.u32 %v1626, 4294901760
    %v2308 = vsub.f32 %v1626, %v2307
    %v2309 = vand.u32 %v2308, 4294901760
    %2310 = vmatpush.msra.mxu0 %v2309
    %v2311 = vand.u32 %v1625, 4294901760
    %v2312 = vsub.f32 %v1625, %v2311
    %v2313 = vand.u32 %v2312, 4294901760
    %2314 = vmatpush.msra.mxu0 %v2313
    %v2315 = vand.u32 %v1624, 4294901760
    %v2316 = vsub.f32 %v1624, %v2315
    %v2317 = vand.u32 %v2316, 4294901760
    %2318 = vmatpush.msra.mxu0 %v2317
    %v2319 = vand.u32 %v1623, 4294901760
    %v2320 = vsub.f32 %v1623, %v2319
    %v2321 = vand.u32 %v2320, 4294901760
    %2322 = vmatpush.msra.mxu0 %v2321
    %v2323 = vand.u32 %v1622, 4294901760
    %v2324 = vsub.f32 %v1622, %v2323
    %v2325 = vand.u32 %v2324, 4294901760
    %2326 = vmatpush.msra.mxu0 %v2325
    %v2327 = vand.u32 %v1621, 4294901760
    %v2328 = vsub.f32 %v1621, %v2327
    %v2329 = vand.u32 %v2328, 4294901760
    %2330 = vmatpush.msra.mxu0 %v2329
    %v2331 = vand.u32 %v1601, 4294901760
    %2332 = vmatmul.f32.gmra.mxu0 %v2331
    %v2333 = vpop.f32.mrf.mxu0
    %v2334 = vadd.f32 %v2259, %v2333
    %v2335 = vand.u32 %v1603, 4294901760
    %2336 = vmatmul.f32.gmra.mxu0 %v2335
    %v2337 = vpop.f32.mrf.mxu0
    %v2338 = vadd.f32 %v2265, %v2337
    %2339 = vdwg.mxu0
    %v2340 = vand.u32 %v1636, 4294901760
    %2341 = vmatpush.msra.mxu0 %v2340
    %v2342 = vand.u32 %v1635, 4294901760
    %2343 = vmatpush.msra.mxu0 %v2342
    %v2344 = vand.u32 %v1634, 4294901760
    %2345 = vmatpush.msra.mxu0 %v2344
    %v2346 = vand.u32 %v1633, 4294901760
    %2347 = vmatpush.msra.mxu0 %v2346
    %v2348 = vand.u32 %v1632, 4294901760
    %2349 = vmatpush.msra.mxu0 %v2348
    %v2350 = vand.u32 %v1631, 4294901760
    %2351 = vmatpush.msra.mxu0 %v2350
    %v2352 = vand.u32 %v1630, 4294901760
    %2353 = vmatpush.msra.mxu0 %v2352
    %v2354 = vand.u32 %v1629, 4294901760
    %2355 = vmatpush.msra.mxu0 %v2354
    %v2356 = vand.u32 %v1628, 4294901760
    %2357 = vmatpush.msra.mxu0 %v2356
    %v2358 = vand.u32 %v1627, 4294901760
    %2359 = vmatpush.msra.mxu0 %v2358
    %v2360 = vand.u32 %v1626, 4294901760
    %2361 = vmatpush.msra.mxu0 %v2360
    %v2362 = vand.u32 %v1625, 4294901760
    %2363 = vmatpush.msra.mxu0 %v2362
    %v2364 = vand.u32 %v1624, 4294901760
    %2365 = vmatpush.msra.mxu0 %v2364
    %v2366 = vand.u32 %v1623, 4294901760
    %2367 = vmatpush.msra.mxu0 %v2366
    %v2368 = vand.u32 %v1622, 4294901760
    %2369 = vmatpush.msra.mxu0 %v2368
    %v2370 = vand.u32 %v1621, 4294901760
    %2371 = vmatpush.msra.mxu0 %v2370
    %v2372 = vand.u32 %v1601, 4294901760
    %2373 = vmatmul.f32.gmra.mxu0 %v2372
    %v2374 = vpop.f32.mrf.mxu0
    %v2375 = vadd.f32 %v2334, %v2374
    %v2376 = vand.u32 %v1603, 4294901760
    %2377 = vmatmul.f32.gmra.mxu0 %v2376
    %v2378 = vpop.f32.mrf.mxu0
    %v2379 = vadd.f32 %v2338, %v2378
    %2380 = vdwg.mxu0
    %v2381 = vadd.f32 %v1593, %v2375
    %v2382 = vadd.f32 %v1597, %v2379
    %v2383 = vld [vmem:[%s2] sm:$0x1]
    %v2385 = vperm.slane %v2383, 0
    %v2387 = vadd.f32 %v2381, %v2385
    %v2388 = vadd.f32 %v2382, %v2385
    %v2389 = vmax.f32 %v2387, 0.0
    %v2390 = vmax.f32 %v2388, 0.0
    %v2391 = vld [vmem:[%s3] sm:$0xff]
    %v2392 = vld [vmem:[%s3 + $0x8] sm:$0xff]
    %v2393 = vld [vmem:[%s3 + $0x10] sm:$0xff]
    %v2394 = vld [vmem:[%s3 + $0x18] sm:$0xff]
    %v2395 = vld [vmem:[%s3 + $0x20] sm:$0xff]
    %v2396 = vld [vmem:[%s3 + $0x28] sm:$0xff]
    %v2397 = vld [vmem:[%s3 + $0x30] sm:$0xff]
    %v2398 = vld [vmem:[%s3 + $0x38] sm:$0xff]
    %v2399 = vld [vmem:[%s3 + $0x40] sm:$0xff]
    %v2400 = vld [vmem:[%s3 + $0x48] sm:$0xff]
    %v2401 = vld [vmem:[%s3 + $0x50] sm:$0xff]
    %v2402 = vld [vmem:[%s3 + $0x58] sm:$0xff]
    %v2403 = vld [vmem:[%s3 + $0x60] sm:$0xff]
    %v2404 = vld [vmem:[%s3 + $0x68] sm:$0xff]
    %v2405 = vld [vmem:[%s3 + $0x70] sm:$0xff]
    %v2406 = vld [vmem:[%s3 + $0x78] sm:$0xff]
    %v2407 = vld [vmem:[%s4] sm:$0x1]
    %v2409 = vperm.slane %v2407, 0
    %v2411 = vand.u32 %v2406, 4294901760
    %2412 = vmatpush.msra.mxu0 %v2411
    %v2413 = vand.u32 %v2405, 4294901760
    %2414 = vmatpush.msra.mxu0 %v2413
    %v2415 = vand.u32 %v2404, 4294901760
    %2416 = vmatpush.msra.mxu0 %v2415
    %v2417 = vand.u32 %v2403, 4294901760
    %2418 = vmatpush.msra.mxu0 %v2417
    %v2419 = vand.u32 %v2402, 4294901760
    %2420 = vmatpush.msra.mxu0 %v2419
    %v2421 = vand.u32 %v2401, 4294901760
    %2422 = vmatpush.msra.mxu0 %v2421
    %v2423 = vand.u32 %v2400, 4294901760
    %2424 = vmatpush.msra.mxu0 %v2423
    %v2425 = vand.u32 %v2399, 4294901760
    %2426 = vmatpush.msra.mxu0 %v2425
    %v2427 = vand.u32 %v2398, 4294901760
    %2428 = vmatpush.msra.mxu0 %v2427
    %v2429 = vand.u32 %v2397, 4294901760
    %2430 = vmatpush.msra.mxu0 %v2429
    %v2431 = vand.u32 %v2396, 4294901760
    %2432 = vmatpush.msra.mxu0 %v2431
    %v2433 = vand.u32 %v2395, 4294901760
    %2434 = vmatpush.msra.mxu0 %v2433
    %v2435 = vand.u32 %v2394, 4294901760
    %2436 = vmatpush.msra.mxu0 %v2435
    %v2437 = vand.u32 %v2393, 4294901760
    %2438 = vmatpush.msra.mxu0 %v2437
    %v2439 = vand.u32 %v2392, 4294901760
    %2440 = vmatpush.msra.mxu0 %v2439
    %v2441 = vand.u32 %v2391, 4294901760
    %2442 = vmatpush.msra.mxu0 %v2441
    %v2443 = vand.u32 %v2389, 4294901760
    %v2444 = vsub.f32 %v2389, %v2443
    %v2445 = vand.u32 %v2444, 4294901760
    %v2446 = vsub.f32 %v2444, %v2445
    %v2447 = vand.u32 %v2446, 4294901760
    %2448 = vmatmul.f32.gmra.mxu0 %v2447
    %v2449 = vpop.f32.mrf.mxu0
    %v2450 = vadd.f32 %v2409, %v2449
    %v2451 = vand.u32 %v2390, 4294901760
    %v2452 = vsub.f32 %v2390, %v2451
    %v2453 = vand.u32 %v2452, 4294901760
    %v2454 = vsub.f32 %v2452, %v2453
    %v2455 = vand.u32 %v2454, 4294901760
    %2456 = vmatmul.f32.gmra.mxu0 %v2455
    %v2457 = vpop.f32.mrf.mxu0
    %v2458 = vadd.f32 %v2409, %v2457
    %2459 = vdwg.mxu0
    %v2460 = vand.u32 %v2406, 4294901760
    %v2461 = vsub.f32 %v2406, %v2460
    %v2462 = vand.u32 %v2461, 4294901760
    %v2463 = vsub.f32 %v2461, %v2462
    %v2464 = vand.u32 %v2463, 4294901760
    %2465 = vmatpush.msra.mxu0 %v2464
    %v2466 = vand.u32 %v2405, 4294901760
    %v2467 = vsub.f32 %v2405, %v2466
    %v2468 = vand.u32 %v2467, 4294901760
    %v2469 = vsub.f32 %v2467, %v2468
    %v2470 = vand.u32 %v2469, 4294901760
    %2471 = vmatpush.msra.mxu0 %v2470
    %v2472 = vand.u32 %v2404, 4294901760
    %v2473 = vsub.f32 %v2404, %v2472
    %v2474 = vand.u32 %v2473, 4294901760
    %v2475 = vsub.f32 %v2473, %v2474
    %v2476 = vand.u32 %v2475, 4294901760
    %2477 = vmatpush.msra.mxu0 %v2476
    %v2478 = vand.u32 %v2403, 4294901760
    %v2479 = vsub.f32 %v2403, %v2478
    %v2480 = vand.u32 %v2479, 4294901760
    %v2481 = vsub.f32 %v2479, %v2480
    %v2482 = vand.u32 %v2481, 4294901760
    %2483 = vmatpush.msra.mxu0 %v2482
    %v2484 = vand.u32 %v2402, 4294901760
    %v2485 = vsub.f32 %v2402, %v2484
    %v2486 = vand.u32 %v2485, 4294901760
    %v2487 = vsub.f32 %v2485, %v2486
    %v2488 = vand.u32 %v2487, 4294901760
    %2489 = vmatpush.msra.mxu0 %v2488
    %v2490 = vand.u32 %v2401, 4294901760
    %v2491 = vsub.f32 %v2401, %v2490
    %v2492 = vand.u32 %v2491, 4294901760
    %v2493 = vsub.f32 %v2491, %v2492
    %v2494 = vand.u32 %v2493, 4294901760
    %2495 = vmatpush.msra.mxu0 %v2494
    %v2496 = vand.u32 %v2400, 4294901760
    %v2497 = vsub.f32 %v2400, %v2496
    %v2498 = vand.u32 %v2497, 4294901760
    %v2499 = vsub.f32 %v2497, %v2498
    %v2500 = vand.u32 %v2499, 4294901760
    %2501 = vmatpush.msra.mxu0 %v2500
    %v2502 = vand.u32 %v2399, 4294901760
    %v2503 = vsub.f32 %v2399, %v2502
    %v2504 = vand.u32 %v2503, 4294901760
    %v2505 = vsub.f32 %v2503, %v2504
    %v2506 = vand.u32 %v2505, 4294901760
    %2507 = vmatpush.msra.mxu0 %v2506
    %v2508 = vand.u32 %v2398, 4294901760
    %v2509 = vsub.f32 %v2398, %v2508
    %v2510 = vand.u32 %v2509, 4294901760
    %v2511 = vsub.f32 %v2509, %v2510
    %v2512 = vand.u32 %v2511, 4294901760
    %2513 = vmatpush.msra.mxu0 %v2512
    %v2514 = vand.u32 %v2397, 4294901760
    %v2515 = vsub.f32 %v2397, %v2514
    %v2516 = vand.u32 %v2515, 4294901760
    %v2517 = vsub.f32 %v2515, %v2516
    %v2518 = vand.u32 %v2517, 4294901760
    %2519 = vmatpush.msra.mxu0 %v2518
    %v2520 = vand.u32 %v2396, 4294901760
    %v2521 = vsub.f32 %v2396, %v2520
    %v2522 = vand.u32 %v2521, 4294901760
    %v2523 = vsub.f32 %v2521, %v2522
    %v2524 = vand.u32 %v2523, 4294901760
    %2525 = vmatpush.msra.mxu0 %v2524
    %v2526 = vand.u32 %v2395, 4294901760
    %v2527 = vsub.f32 %v2395, %v2526
    %v2528 = vand.u32 %v2527, 4294901760
    %v2529 = vsub.f32 %v2527, %v2528
    %v2530 = vand.u32 %v2529, 4294901760
    %2531 = vmatpush.msra.mxu0 %v2530
    %v2532 = vand.u32 %v2394, 4294901760
    %v2533 = vsub.f32 %v2394, %v2532
    %v2534 = vand.u32 %v2533, 4294901760
    %v2535 = vsub.f32 %v2533, %v2534
    %v2536 = vand.u32 %v2535, 4294901760
    %2537 = vmatpush.msra.mxu0 %v2536
    %v2538 = vand.u32 %v2393, 4294901760
    %v2539 = vsub.f32 %v2393, %v2538
    %v2540 = vand.u32 %v2539, 4294901760
    %v2541 = vsub.f32 %v2539, %v2540
    %v2542 = vand.u32 %v2541, 4294901760
    %2543 = vmatpush.msra.mxu0 %v2542
    %v2544 = vand.u32 %v2392, 4294901760
    %v2545 = vsub.f32 %v2392, %v2544
    %v2546 = vand.u32 %v2545, 4294901760
    %v2547 = vsub.f32 %v2545, %v2546
    %v2548 = vand.u32 %v2547, 4294901760
    %2549 = vmatpush.msra.mxu0 %v2548
    %v2550 = vand.u32 %v2391, 4294901760
    %v2551 = vsub.f32 %v2391, %v2550
    %v2552 = vand.u32 %v2551, 4294901760
    %v2553 = vsub.f32 %v2551, %v2552
    %v2554 = vand.u32 %v2553, 4294901760
    %2555 = vmatpush.msra.mxu0 %v2554
    %v2556 = vand.u32 %v2389, 4294901760
    %2557 = vmatmul.f32.gmra.mxu0 %v2556
    %v2558 = vpop.f32.mrf.mxu0
    %v2559 = vadd.f32 %v2450, %v2558
    %v2560 = vand.u32 %v2390, 4294901760
    %2561 = vmatmul.f32.gmra.mxu0 %v2560
    %v2562 = vpop.f32.mrf.mxu0
    %v2563 = vadd.f32 %v2458, %v2562
    %2564 = vdwg.mxu0
    %v2565 = vand.u32 %v2406, 4294901760
    %v2566 = vsub.f32 %v2406, %v2565
    %2567 = vmatpush.msra.mxu0 %v2566
    %v2568 = vand.u32 %v2405, 4294901760
    %v2569 = vsub.f32 %v2405, %v2568
    %2570 = vmatpush.msra.mxu0 %v2569
    %v2571 = vand.u32 %v2404, 4294901760
    %v2572 = vsub.f32 %v2404, %v2571
    %2573 = vmatpush.msra.mxu0 %v2572
    %v2574 = vand.u32 %v2403, 4294901760
    %v2575 = vsub.f32 %v2403, %v2574
    %2576 = vmatpush.msra.mxu0 %v2575
    %v2577 = vand.u32 %v2402, 4294901760
    %v2578 = vsub.f32 %v2402, %v2577
    %2579 = vmatpush.msra.mxu0 %v2578
    %v2580 = vand.u32 %v2401, 4294901760
    %v2581 = vsub.f32 %v2401, %v2580
    %2582 = vmatpush.msra.mxu0 %v2581
    %v2583 = vand.u32 %v2400, 4294901760
    %v2584 = vsub.f32 %v2400, %v2583
    %2585 = vmatpush.msra.mxu0 %v2584
    %v2586 = vand.u32 %v2399, 4294901760
    %v2587 = vsub.f32 %v2399, %v2586
    %2588 = vmatpush.msra.mxu0 %v2587
    %v2589 = vand.u32 %v2398, 4294901760
    %v2590 = vsub.f32 %v2398, %v2589
    %2591 = vmatpush.msra.mxu0 %v2590
    %v2592 = vand.u32 %v2397, 4294901760
    %v2593 = vsub.f32 %v2397, %v2592
    %2594 = vmatpush.msra.mxu0 %v2593
    %v2595 = vand.u32 %v2396, 4294901760
    %v2596 = vsub.f32 %v2396, %v2595
    %2597 = vmatpush.msra.mxu0 %v2596
    %v2598 = vand.u32 %v2395, 4294901760
    %v2599 = vsub.f32 %v2395, %v2598
    %2600 = vmatpush.msra.mxu0 %v2599
    %v2601 = vand.u32 %v2394, 4294901760
    %v2602 = vsub.f32 %v2394, %v2601
    %2603 = vmatpush.msra.mxu0 %v2602
    %v2604 = vand.u32 %v2393, 4294901760
    %v2605 = vsub.f32 %v2393, %v2604
    %2606 = vmatpush.msra.mxu0 %v2605
    %v2607 = vand.u32 %v2392, 4294901760
    %v2608 = vsub.f32 %v2392, %v2607
    %2609 = vmatpush.msra.mxu0 %v2608
    %v2610 = vand.u32 %v2391, 4294901760
    %v2611 = vsub.f32 %v2391, %v2610
    %2612 = vmatpush.msra.mxu0 %v2611
    %v2613 = vand.u32 %v2389, 4294901760
    %v2614 = vsub.f32 %v2389, %v2613
    %2615 = vmatmul.f32.gmra.mxu0 %v2614
    %v2616 = vpop.f32.mrf.mxu0
    %v2617 = vadd.f32 %v2559, %v2616
    %v2618 = vand.u32 %v2390, 4294901760
    %v2619 = vsub.f32 %v2390, %v2618
    %2620 = vmatmul.f32.gmra.mxu0 %v2619
    %v2621 = vpop.f32.mrf.mxu0
    %v2622 = vadd.f32 %v2563, %v2621
    %2623 = vdwg.mxu0
    %v2624 = vand.u32 %v2406, 4294901760
    %2625 = vmatpush.msra.mxu0 %v2624
    %v2626 = vand.u32 %v2405, 4294901760
    %2627 = vmatpush.msra.mxu0 %v2626
    %v2628 = vand.u32 %v2404, 4294901760
    %2629 = vmatpush.msra.mxu0 %v2628
    %v2630 = vand.u32 %v2403, 4294901760
    %2631 = vmatpush.msra.mxu0 %v2630
    %v2632 = vand.u32 %v2402, 4294901760
    %2633 = vmatpush.msra.mxu0 %v2632
    %v2634 = vand.u32 %v2401, 4294901760
    %2635 = vmatpush.msra.mxu0 %v2634
    %v2636 = vand.u32 %v2400, 4294901760
    %2637 = vmatpush.msra.mxu0 %v2636
    %v2638 = vand.u32 %v2399, 4294901760
    %2639 = vmatpush.msra.mxu0 %v2638
    %v2640 = vand.u32 %v2398, 4294901760
    %2641 = vmatpush.msra.mxu0 %v2640
    %v2642 = vand.u32 %v2397, 4294901760
    %2643 = vmatpush.msra.mxu0 %v2642
    %v2644 = vand.u32 %v2396, 4294901760
    %2645 = vmatpush.msra.mxu0 %v2644
    %v2646 = vand.u32 %v2395, 4294901760
    %2647 = vmatpush.msra.mxu0 %v2646
    %v2648 = vand.u32 %v2394, 4294901760
    %2649 = vmatpush.msra.mxu0 %v2648
    %v2650 = vand.u32 %v2393, 4294901760
    %2651 = vmatpush.msra.mxu0 %v2650
    %v2652 = vand.u32 %v2392, 4294901760
    %2653 = vmatpush.msra.mxu0 %v2652
    %v2654 = vand.u32 %v2391, 4294901760
    %2655 = vmatpush.msra.mxu0 %v2654
    %v2656 = vand.u32 %v2389, 4294901760
    %v2657 = vsub.f32 %v2389, %v2656
    %v2658 = vand.u32 %v2657, 4294901760
    %2659 = vmatmul.f32.gmra.mxu0 %v2658
    %v2660 = vpop.f32.mrf.mxu0
    %v2661 = vadd.f32 %v2617, %v2660
    %v2662 = vand.u32 %v2390, 4294901760
    %v2663 = vsub.f32 %v2390, %v2662
    %v2664 = vand.u32 %v2663, 4294901760
    %2665 = vmatmul.f32.gmra.mxu0 %v2664
    %v2666 = vpop.f32.mrf.mxu0
    %v2667 = vadd.f32 %v2622, %v2666
    %2668 = vdwg.mxu0
    %v2669 = vand.u32 %v2406, 4294901760
    %v2670 = vsub.f32 %v2406, %v2669
    %v2671 = vand.u32 %v2670, 4294901760
    %2672 = vmatpush.msra.mxu0 %v2671
    %v2673 = vand.u32 %v2405, 4294901760
    %v2674 = vsub.f32 %v2405, %v2673
    %v2675 = vand.u32 %v2674, 4294901760
    %2676 = vmatpush.msra.mxu0 %v2675
    %v2677 = vand.u32 %v2404, 4294901760
    %v2678 = vsub.f32 %v2404, %v2677
    %v2679 = vand.u32 %v2678, 4294901760
    %2680 = vmatpush.msra.mxu0 %v2679
    %v2681 = vand.u32 %v2403, 4294901760
    %v2682 = vsub.f32 %v2403, %v2681
    %v2683 = vand.u32 %v2682, 4294901760
    %2684 = vmatpush.msra.mxu0 %v2683
    %v2685 = vand.u32 %v2402, 4294901760
    %v2686 = vsub.f32 %v2402, %v2685
    %v2687 = vand.u32 %v2686, 4294901760
    %2688 = vmatpush.msra.mxu0 %v2687
    %v2689 = vand.u32 %v2401, 4294901760
    %v2690 = vsub.f32 %v2401, %v2689
    %v2691 = vand.u32 %v2690, 4294901760
    %2692 = vmatpush.msra.mxu0 %v2691
    %v2693 = vand.u32 %v2400, 4294901760
    %v2694 = vsub.f32 %v2400, %v2693
    %v2695 = vand.u32 %v2694, 4294901760
    %2696 = vmatpush.msra.mxu0 %v2695
    %v2697 = vand.u32 %v2399, 4294901760
    %v2698 = vsub.f32 %v2399, %v2697
    %v2699 = vand.u32 %v2698, 4294901760
    %2700 = vmatpush.msra.mxu0 %v2699
    %v2701 = vand.u32 %v2398, 4294901760
    %v2702 = vsub.f32 %v2398, %v2701
    %v2703 = vand.u32 %v2702, 4294901760
    %2704 = vmatpush.msra.mxu0 %v2703
    %v2705 = vand.u32 %v2397, 4294901760
    %v2706 = vsub.f32 %v2397, %v2705
    %v2707 = vand.u32 %v2706, 4294901760
    %2708 = vmatpush.msra.mxu0 %v2707
    %v2709 = vand.u32 %v2396, 4294901760
    %v2710 = vsub.f32 %v2396, %v2709
    %v2711 = vand.u32 %v2710, 4294901760
    %2712 = vmatpush.msra.mxu0 %v2711
    %v2713 = vand.u32 %v2395, 4294901760
    %v2714 = vsub.f32 %v2395, %v2713
    %v2715 = vand.u32 %v2714, 4294901760
    %2716 = vmatpush.msra.mxu0 %v2715
    %v2717 = vand.u32 %v2394, 4294901760
    %v2718 = vsub.f32 %v2394, %v2717
    %v2719 = vand.u32 %v2718, 4294901760
    %2720 = vmatpush.msra.mxu0 %v2719
    %v2721 = vand.u32 %v2393, 4294901760
    %v2722 = vsub.f32 %v2393, %v2721
    %v2723 = vand.u32 %v2722, 4294901760
    %2724 = vmatpush.msra.mxu0 %v2723
    %v2725 = vand.u32 %v2392, 4294901760
    %v2726 = vsub.f32 %v2392, %v2725
    %v2727 = vand.u32 %v2726, 4294901760
    %2728 = vmatpush.msra.mxu0 %v2727
    %v2729 = vand.u32 %v2391, 4294901760
    %v2730 = vsub.f32 %v2391, %v2729
    %v2731 = vand.u32 %v2730, 4294901760
    %2732 = vmatpush.msra.mxu0 %v2731
    %v2733 = vand.u32 %v2389, 4294901760
    %2734 = vmatmul.f32.gmra.mxu0 %v2733
    %v2735 = vpop.f32.mrf.mxu0
    %v2736 = vadd.f32 %v2661, %v2735
    %v2737 = vand.u32 %v2390, 4294901760
    %2738 = vmatmul.f32.gmra.mxu0 %v2737
    %v2739 = vpop.f32.mrf.mxu0
    %v2740 = vadd.f32 %v2667, %v2739
    %2741 = vdwg.mxu0
    %v2742 = vand.u32 %v2406, 4294901760
    %2743 = vmatpush.msra.mxu0 %v2742
    %v2744 = vand.u32 %v2405, 4294901760
    %2745 = vmatpush.msra.mxu0 %v2744
    %v2746 = vand.u32 %v2404, 4294901760
    %2747 = vmatpush.msra.mxu0 %v2746
    %v2748 = vand.u32 %v2403, 4294901760
    %2749 = vmatpush.msra.mxu0 %v2748
    %v2750 = vand.u32 %v2402, 4294901760
    %2751 = vmatpush.msra.mxu0 %v2750
    %v2752 = vand.u32 %v2401, 4294901760
    %2753 = vmatpush.msra.mxu0 %v2752
    %v2754 = vand.u32 %v2400, 4294901760
    %2755 = vmatpush.msra.mxu0 %v2754
    %v2756 = vand.u32 %v2399, 4294901760
    %2757 = vmatpush.msra.mxu0 %v2756
    %v2758 = vand.u32 %v2398, 4294901760
    %2759 = vmatpush.msra.mxu0 %v2758
    %v2760 = vand.u32 %v2397, 4294901760
    %2761 = vmatpush.msra.mxu0 %v2760
    %v2762 = vand.u32 %v2396, 4294901760
    %2763 = vmatpush.msra.mxu0 %v2762
    %v2764 = vand.u32 %v2395, 4294901760
    %2765 = vmatpush.msra.mxu0 %v2764
    %v2766 = vand.u32 %v2394, 4294901760
    %2767 = vmatpush.msra.mxu0 %v2766
    %v2768 = vand.u32 %v2393, 4294901760
    %2769 = vmatpush.msra.mxu0 %v2768
    %v2770 = vand.u32 %v2392, 4294901760
    %2771 = vmatpush.msra.mxu0 %v2770
    %v2772 = vand.u32 %v2391, 4294901760
    %2773 = vmatpush.msra.mxu0 %v2772
    %v2774 = vand.u32 %v2389, 4294901760
    %2775 = vmatmul.f32.gmra.mxu0 %v2774
    %v2776 = vpop.f32.mrf.mxu0
    %v2777 = vadd.f32 %v2736, %v2776
    %v2778 = vand.u32 %v2390, 4294901760
    %2779 = vmatmul.f32.gmra.mxu0 %v2778
    %v2780 = vpop.f32.mrf.mxu0
    %v2781 = vadd.f32 %v2740, %v2780
    %2782 = vdwg.mxu0
    %vm2783 = vcmask 261120
    %2784 = vst.msk [vmem:[#allocation5] sm:$0xff] %vm2783, %v2777
    %2785 = vst.msk [vmem:[#allocation5 + $0x8] sm:$0xff] %vm2783, %v2781
    // Predicated region
    $region26: #{tpu_custom_call.1} parent=1 // pred_check
      _
    $region27: #{tpu_custom_call.1} parent=1 // pred_check_branch
      %2787 = sbr.rel (0) target = $region29
    $region28: #{tpu_custom_call.1} parent=1 // pred_region
      %2789 = vsyncadd [#allocation4], 0
      %s2790 = sshll.u32 [#allocation5], 4
      %s2791 = int_to_ptr.vmem [resolvable:$true] %s2790
      %s2792 = sshll.u32 %s5, 4
      %s2793 = int_to_ptr.hbm [resolvable:$true] %s2792
      %2798 = dma.vmem_to_hbm [thread:$0]  %s2791, 256, %s2793, [#allocation4], 128, 128, 8
    $region29: #{tpu_custom_call.1} parent=1 // pred_fallthru
      _
    // Predicated region
    $region30: #{tpu_custom_call.1} parent=1 // pred_check
      _
    $region31: #{tpu_custom_call.1} parent=1 // pred_check_branch
      %2800 = sbr.rel (0) target = $region33
    $region32: #{tpu_custom_call.1} parent=1 // pred_region
      %2802 = dma.done [#allocation4], 256
    $region33: #{tpu_custom_call.1} parent=1 // pred_fallthru
      _
    %2803 = vsyncpa [#allocation3], 1
    %2804 = vsyncpa [#allocation4], 1

</llo_original>
